<compile_context>
chip_gen: v5e
topology: v5e:2x2
jax: 0.10.0
libtpu: 0.0.40
codegen_flags: <defaults>
</compile_context>

<pallas_src>
import functools

import jax
import jax.numpy as jnp
from jax.experimental import pallas as pl
from jax.experimental.pallas import tpu as pltpu


# ----------------------------------------------------------------------------
# Pallas kernel: full Transformer stack (TA=False, attn_mask=None).
# Token layout inside the kernel is (T, D), T = N * L, tokens batch-major
# (row = n*L + l) so per-head attention is a plain single-batch-dim einsum.
# ----------------------------------------------------------------------------
def transformer_kernel(
    x_ref,                       # (T, D)    input tokens (read at layer 0 only)
    ln1w_ref, ln1b_ref,          # (1, D)
    wqkv_ref, bqkv_ref,          # (D, 3D), (1, 3D)  fused, pre-transposed, q pre-scaled
    wo_ref, bo_ref,              # (D, D),  (1, D)   pre-transposed
    ln2w_ref, ln2b_ref,          # (1, D)
    wfc_ref, bfc_ref,            # (D, 4D), (1, 4D)  pre-transposed
    wpr_ref, bpr_ref,            # (4D, D), (1, D)   pre-transposed
    o_ref,                       # (T, D)
    x_state,                     # VMEM scratch (T, D) f32 — residual carry across layers
    *, n_head, n_batch, seq_len,
):
    layer = pl.program_id(0)

    @pl.when(layer == 0)
    def _():
        x_state[...] = x_ref[...].astype(jnp.float32)

    x = x_state[...]                              # (T, D) f32
    T, D = x.shape
    H, N, L = n_head, n_batch, seq_len
    Dh = D // H
    cdt = wqkv_ref.dtype                          # matmul compute dtype (bf16), f32 accumulation

    def layer_norm(v, w_ref, b_ref):
        mu = jnp.mean(v, axis=-1, keepdims=True)
        var = jnp.mean(jnp.square(v - mu), axis=-1, keepdims=True)
        return ((v - mu) * jax.lax.rsqrt(var + 1e-5)
                * w_ref[...].astype(jnp.float32) + b_ref[...].astype(jnp.float32))

    # ----- attention branch: x + out_proj(MHA(LN1(x))) -----
    h1 = layer_norm(x, ln1w_ref, ln1b_ref)
    qkv = (jnp.dot(h1.astype(cdt), wqkv_ref[...], preferred_element_type=jnp.float32)
           + bqkv_ref[...].astype(jnp.float32))                       # (T, 3D)

    attn_out = None
    for h in range(H):                            # static loop over heads only
        lo = h * Dh
        q_h = qkv[:, lo:lo + Dh].reshape(N, L, Dh)
        k_h = qkv[:, D + lo:D + lo + Dh].reshape(N, L, Dh)
        v_h = qkv[:, 2 * D + lo:2 * D + lo + Dh].reshape(N, L, Dh)
        # 1/sqrt(Dh) already folded into wq/bq — no score scaling here.
        s = jnp.einsum('nqd,nkd->nqk', q_h.astype(cdt), k_h.astype(cdt),
                       preferred_element_type=jnp.float32)            # (N, L, L)
        s = s - jnp.max(s, axis=-1, keepdims=True)
        e = jnp.exp(s)
        p = e * pl.reciprocal(jnp.sum(e, axis=-1, keepdims=True), approx=True)
        o_h = jnp.einsum('nqk,nkd->nqd', p.astype(cdt), v_h.astype(cdt),
                         preferred_element_type=jnp.float32)          # (N, L, Dh)
        # head-concat + out_proj folded into per-head matmul accumulation
        proj_h = jnp.dot(o_h.reshape(T, Dh).astype(cdt), wo_ref[lo:lo + Dh, :],
                         preferred_element_type=jnp.float32)          # (T, D)
        attn_out = proj_h if attn_out is None else attn_out + proj_h

    x1 = x + attn_out + bo_ref[...].astype(jnp.float32)               # residual 1

    # ----- MLP branch: x1 + c_proj(QuickGELU(c_fc(LN2(x1)))) -----
    h2 = layer_norm(x1, ln2w_ref, ln2b_ref)
    fc = (jnp.dot(h2.astype(cdt), wfc_ref[...], preferred_element_type=jnp.float32)
          + bfc_ref[...].astype(jnp.float32))                         # (T, 4D)
    g = fc * jax.nn.sigmoid(1.702 * fc)                               # QuickGELU
    y = x1 + (jnp.dot(g.astype(cdt), wpr_ref[...], preferred_element_type=jnp.float32)
              + bpr_ref[...].astype(jnp.float32))                     # residual 2

    x_state[...] = y

    @pl.when(layer == pl.num_programs(0) - 1)
    def _():
        o_ref[...] = y.astype(o_ref.dtype)


# ----------------------------------------------------------------------------
# Wrapper
# ----------------------------------------------------------------------------
def init_block_params(key, width):
    """PyTorch-layout parameters (weights are out_features x in_features)."""
    ks = jax.random.split(key, 16)
    std = 0.02
    D = width
    return {
        "ln1_w": 1.0 + 0.1 * jax.random.normal(ks[0], (1, D), jnp.float32),
        "ln1_b": 0.1 * jax.random.normal(ks[1], (1, D), jnp.float32),
        "wq": std * jax.random.normal(ks[2], (D, D), jnp.float32),
        "bq": 0.1 * jax.random.normal(ks[3], (1, D), jnp.float32),
        "wk": std * jax.random.normal(ks[4], (D, D), jnp.float32),
        "bk": 0.1 * jax.random.normal(ks[5], (1, D), jnp.float32),
        "wv": std * jax.random.normal(ks[6], (D, D), jnp.float32),
        "bv": 0.1 * jax.random.normal(ks[7], (1, D), jnp.float32),
        "wo": std * jax.random.normal(ks[8], (D, D), jnp.float32),
        "bo": 0.1 * jax.random.normal(ks[9], (1, D), jnp.float32),
        "ln2_w": 1.0 + 0.1 * jax.random.normal(ks[10], (1, D), jnp.float32),
        "ln2_b": 0.1 * jax.random.normal(ks[11], (1, D), jnp.float32),
        "wfc": std * jax.random.normal(ks[12], (4 * D, D), jnp.float32),
        "bfc": 0.1 * jax.random.normal(ks[13], (1, 4 * D), jnp.float32),
        "wpr": std * jax.random.normal(ks[14], (D, 4 * D), jnp.float32),
        "bpr": 0.1 * jax.random.normal(ks[15], (1, D), jnp.float32),
    }


def prepare_stacked_params(layer_params, n_head, param_dtype=jnp.bfloat16):
    """Fuse QKV, pre-transpose everything, fold 1/sqrt(Dh) into q, cast big
    matrices to bf16 and stack all layers along a leading 'layer' axis."""
    D = layer_params[0]["wq"].shape[0]
    assert D % n_head == 0
    scale = 1.0 / ((D // n_head) ** 0.5)
    keys = ["ln1_w", "ln1_b", "wqkv", "bqkv", "wo", "bo",
            "ln2_w", "ln2_b", "wfc", "bfc", "wpr", "bpr"]
    acc = {k: [] for k in keys}
    for p in layer_params:
        acc["ln1_w"].append(p["ln1_w"]); acc["ln1_b"].append(p["ln1_b"])
        acc["wqkv"].append(jnp.concatenate(
            [(p["wq"] * scale).T, p["wk"].T, p["wv"].T], axis=1).astype(param_dtype))
        acc["bqkv"].append(jnp.concatenate([p["bq"] * scale, p["bk"], p["bv"]], axis=1))
        acc["wo"].append(p["wo"].T.astype(param_dtype)); acc["bo"].append(p["bo"])
        acc["ln2_w"].append(p["ln2_w"]); acc["ln2_b"].append(p["ln2_b"])
        acc["wfc"].append(p["wfc"].T.astype(param_dtype)); acc["bfc"].append(p["bfc"])
        acc["wpr"].append(p["wpr"].T.astype(param_dtype)); acc["bpr"].append(p["bpr"])
    return {k: jnp.stack(v, axis=0) for k, v in acc.items()}


def transformer_forward(x, stacked, n_head):
    L, N, D = x.shape
    assert D % n_head == 0
    T = N * L
    n_layers = stacked["wqkv"].shape[0]
    x_t = jnp.transpose(x, (1, 0, 2)).reshape(T, D)       # batch-major, lane-dense tokens

    def w_spec(*dims):
        return pl.BlockSpec((None,) + dims, lambda l: (l,) + (0,) * len(dims))

    in_specs = [
        pl.BlockSpec((T, D), lambda l: (0, 0)),            # x (resident; layer axis constant)
        w_spec(1, D), w_spec(1, D),                        # ln1 w, b
        w_spec(D, 3 * D), w_spec(1, 3 * D),                # fused qkv
        w_spec(D, D), w_spec(1, D),                        # out proj
        w_spec(1, D), w_spec(1, D),                        # ln2 w, b
        w_spec(D, 4 * D), w_spec(1, 4 * D),                # c_fc
        w_spec(4 * D, D), w_spec(1, D),                    # c_proj
    ]
    out_spec = pl.BlockSpec((T, D), lambda l: (0, 0))      # resident accumulator output

    y = pl.pallas_call(
        functools.partial(transformer_kernel, n_head=n_head, n_batch=N, seq_len=L),
        out_shape=jax.ShapeDtypeStruct((T, D), x.dtype),
        grid_spec=pltpu.PrefetchScalarGridSpec(
            num_scalar_prefetch=0,
            grid=(n_layers,),
            in_specs=in_specs,
            out_specs=out_spec,
            scratch_shapes=[pltpu.VMEM((T, D), jnp.float32)],
        ),
        compiler_params=pltpu.CompilerParams(
            dimension_semantics=("arbitrary",),            # layer axis carries the residual
            vmem_limit_bytes=48 * 1024 * 1024,             # headroom, safe on v5e/v6e/v7x
        ),
    )(x_t, stacked["ln1_w"], stacked["ln1_b"], stacked["wqkv"], stacked["bqkv"],
      stacked["wo"], stacked["bo"], stacked["ln2_w"], stacked["ln2_b"],
      stacked["wfc"], stacked["bfc"], stacked["wpr"], stacked["bpr"])

    return jnp.transpose(y.reshape(N, L, D), (1, 0, 2))


# ----------------------------------------------------------------------------
# Pure-JAX f32 reference of the PyTorch module (TA=False, eval) for validation.
# ----------------------------------------------------------------------------
def _reference_forward(x, layer_params, n_head):
    L, N, D = x.shape
    Dh = D // n_head

    def ln(v, w, b):
        mu = v.mean(-1, keepdims=True)
        var = ((v - mu) ** 2).mean(-1, keepdims=True)
        return (v - mu) / jnp.sqrt(var + 1e-5) * w[0] + b[0]

    for p in layer_params:
        h = ln(x, p["ln1_w"], p["ln1_b"]).reshape(L * N, D)
        q = (h @ p["wq"].T + p["bq"][0]).reshape(L, N, n_head, Dh)
        k = (h @ p["wk"].T + p["bk"][0]).reshape(L, N, n_head, Dh)
        v = (h @ p["wv"].T + p["bv"][0]).reshape(L, N, n_head, Dh)
        s = jnp.einsum('qnhd,knhd->nhqk', q, k) / (Dh ** 0.5)
        a = jax.nn.softmax(s, axis=-1)
        o = jnp.einsum('nhqk,knhd->qnhd', a, v).reshape(L * N, D)
        x = x + (o @ p["wo"].T + p["bo"][0]).reshape(L, N, D)
        h2 = ln(x, p["ln2_w"], p["ln2_b"]).reshape(L * N, D)
        fc = h2 @ p["wfc"].T + p["bfc"][0]
        g = fc * jax.nn.sigmoid(1.702 * fc)
        x = x + (g @ p["wpr"].T + p["bpr"][0]).reshape(L, N, D)
    return x


if __name__ == "__main__":
    # Transformer(num_frames=8, width=32, layers=2, heads=4, TA=False), eval mode.
    L, N, D = 8, 2, 32          # (seq, batch, width)
    heads, layers = 4, 2

    key = jax.random.PRNGKey(0)
    kx, kp = jax.random.split(key)
    x = jax.random.normal(kx, (L, N, D), jnp.float32)
    layer_keys = jax.random.split(kp, layers)
    params = [init_block_params(layer_keys[i], D) for i in range(layers)]

    stacked = prepare_stacked_params(params, heads, param_dtype=jnp.bfloat16)
    out = jax.block_until_ready(transformer_forward(x, stacked, heads))

    assert out.shape == (L, N, D)
    assert bool(jnp.all(jnp.isfinite(out)))
    ref = _reference_forward(x, params, heads)
    max_err = float(jnp.max(jnp.abs(out - ref)))
    assert bool(jnp.allclose(out, ref, atol=2e-2, rtol=2e-2)), max_err
    print("KERNEL_OK")
</pallas_src>

<mosaic_0001>
module attributes {stable_mosaic.version = 11 : i64} {
  func.func @transformer_kernel(%arg0: i32, %arg1: memref<16x32xf32, #tpu.memory_space<vmem>>, %arg2: memref<1x1x32xf32, #tpu.memory_space<vmem>>, %arg3: memref<1x1x32xf32, #tpu.memory_space<vmem>>, %arg4: memref<1x32x96xbf16, #tpu.memory_space<vmem>>, %arg5: memref<1x1x96xf32, #tpu.memory_space<vmem>>, %arg6: memref<1x32x32xbf16, #tpu.memory_space<vmem>>, %arg7: memref<1x1x32xf32, #tpu.memory_space<vmem>>, %arg8: memref<1x1x32xf32, #tpu.memory_space<vmem>>, %arg9: memref<1x1x32xf32, #tpu.memory_space<vmem>>, %arg10: memref<1x32x128xbf16, #tpu.memory_space<vmem>>, %arg11: memref<1x1x128xf32, #tpu.memory_space<vmem>>, %arg12: memref<1x128x32xbf16, #tpu.memory_space<vmem>>, %arg13: memref<1x1x32xf32, #tpu.memory_space<vmem>>, %arg14: memref<16x32xf32, #tpu.memory_space<vmem>>, %arg15: memref<16x32xf32, #tpu.memory_space<vmem>>) attributes {dimension_semantics = [#tpu.dimension_semantics<arbitrary>], iteration_bounds = array<i64: 2>, scalar_prefetch = 0 : i64, scratch_operands = 1 : i64, tpu.core_type = #tpu.core_type<tc>, window_params = [{pipeline_mode = #tpu.pipeline_mode<synchronous>, transform_indices = @transform_0, window_bounds = array<i64: 16, 32>}, {transform_indices = @transform_1, window_bounds = array<i64: 1, 1, 32>}, {transform_indices = @transform_2, window_bounds = array<i64: 1, 1, 32>}, {transform_indices = @transform_3, window_bounds = array<i64: 1, 32, 96>}, {transform_indices = @transform_4, window_bounds = array<i64: 1, 1, 96>}, {transform_indices = @transform_5, window_bounds = array<i64: 1, 32, 32>}, {transform_indices = @transform_6, window_bounds = array<i64: 1, 1, 32>}, {transform_indices = @transform_7, window_bounds = array<i64: 1, 1, 32>}, {transform_indices = @transform_8, window_bounds = array<i64: 1, 1, 32>}, {transform_indices = @transform_9, window_bounds = array<i64: 1, 32, 128>}, {transform_indices = @transform_10, window_bounds = array<i64: 1, 1, 128>}, {transform_indices = @transform_11, window_bounds = array<i64: 1, 128, 32>}, {transform_indices = @transform_12, window_bounds = array<i64: 1, 1, 32>}, {pipeline_mode = #tpu.pipeline_mode<synchronous>, transform_indices = @transform_13, window_bounds = array<i64: 16, 32>}]} {
    %c0_i32 = arith.constant 0 : i32
    %0 = arith.cmpi eq, %arg0, %c0_i32 : i32
    %1 = arith.extui %0 : i1 to i32
    %c0_i32_0 = arith.constant 0 : i32
    %2 = arith.cmpi ne, %1, %c0_i32_0 : i32
    scf.if %2 {
      %c0_81 = arith.constant 0 : index
      %c0_82 = arith.constant 0 : index
      %209 = vector.load %arg1[%c0_81, %c0_82] : memref<16x32xf32, #tpu.memory_space<vmem>>, vector<16x32xf32>
      %c0_83 = arith.constant 0 : index
      %c0_84 = arith.constant 0 : index
      %210 = vector.load %arg15[%c0_83, %c0_84] : memref<16x32xf32, #tpu.memory_space<vmem>>, vector<16x32xf32>
      tpu.vector_store %arg15[%c0_83, %c0_84], %209 {strides = array<i32>} : memref<16x32xf32, #tpu.memory_space<vmem>>, vector<16x32xf32>,
    } else {
    }
    %c0 = arith.constant 0 : index
    %c0_1 = arith.constant 0 : index
    %3 = vector.load %arg15[%c0, %c0_1] : memref<16x32xf32, #tpu.memory_space<vmem>>, vector<16x32xf32>
    %cst = arith.constant dense<0.000000e+00> : vector<16xf32>
    %4 = vector.multi_reduction <add>, %3, %cst [1] : vector<16x32xf32> to vector<16xf32>
    %5 = vector.shape_cast %4 : vector<16xf32> to vector<16x1xf32>
    %cst_2 = arith.constant 3.200000e+01 : f32
    %6 = vector.broadcast %cst_2 : f32 to vector<16x1xf32>
    %7 = arith.divf %5, %6 : vector<16x1xf32>
    %8 = vector.broadcast %7 : vector<16x1xf32> to vector<16x32xf32>
    %9 = arith.subf %3, %8 : vector<16x32xf32>
    %10 = arith.mulf %9, %9 : vector<16x32xf32>
    %cst_3 = arith.constant dense<0.000000e+00> : vector<16xf32>
    %11 = vector.multi_reduction <add>, %10, %cst_3 [1] : vector<16x32xf32> to vector<16xf32>
    %12 = vector.shape_cast %11 : vector<16xf32> to vector<16x1xf32>
    %cst_4 = arith.constant 3.200000e+01 : f32
    %13 = vector.broadcast %cst_4 : f32 to vector<16x1xf32>
    %14 = arith.divf %12, %13 : vector<16x1xf32>
    %15 = vector.broadcast %7 : vector<16x1xf32> to vector<16x32xf32>
    %16 = arith.subf %3, %15 : vector<16x32xf32>
    %cst_5 = arith.constant 9.99999974E-6 : f32
    %17 = vector.broadcast %cst_5 : f32 to vector<16x1xf32>
    %18 = arith.addf %14, %17 : vector<16x1xf32>
    %19 = math.rsqrt %18 : vector<16x1xf32>
    %20 = vector.broadcast %19 : vector<16x1xf32> to vector<16x32xf32>
    %21 = arith.mulf %16, %20 : vector<16x32xf32>
    %c0_6 = arith.constant 0 : index
    %c0_7 = arith.constant 0 : index
    %c0_8 = arith.constant 0 : index
    %22 = vector.load %arg2[%c0_6, %c0_7, %c0_8] : memref<1x1x32xf32, #tpu.memory_space<vmem>>, vector<1x1x32xf32>
    %23 = vector.shape_cast %22 : vector<1x1x32xf32> to vector<1x32xf32>
    %24 = vector.broadcast %23 : vector<1x32xf32> to vector<16x32xf32>
    %25 = arith.mulf %21, %24 : vector<16x32xf32>
    %c0_9 = arith.constant 0 : index
    %c0_10 = arith.constant 0 : index
    %c0_11 = arith.constant 0 : index
    %26 = vector.load %arg3[%c0_9, %c0_10, %c0_11] : memref<1x1x32xf32, #tpu.memory_space<vmem>>, vector<1x1x32xf32>
    %27 = vector.shape_cast %26 : vector<1x1x32xf32> to vector<1x32xf32>
    %28 = vector.broadcast %27 : vector<1x32xf32> to vector<16x32xf32>
    %29 = arith.addf %25, %28 : vector<16x32xf32>
    %30 = arith.truncf %29 : vector<16x32xf32> to vector<16x32xbf16>
    %c0_12 = arith.constant 0 : index
    %c0_13 = arith.constant 0 : index
    %c0_14 = arith.constant 0 : index
    %31 = vector.load %arg4[%c0_12, %c0_13, %c0_14] : memref<1x32x96xbf16, #tpu.memory_space<vmem>>, vector<1x32x96xbf16>
    %32 = vector.shape_cast %31 : vector<1x32x96xbf16> to vector<32x96xbf16>
    %cst_15 = arith.constant dense<0.000000e+00> : vector<16x96xf32>
    %33 = tpu.matmul %30, %32, %cst_15 {dimension_numbers = #tpu.dot_dimension_numbers<[1], [0], [0], [1], [0, 0, 1, 1], [], []>} : vector<16x32xbf16>, vector<32x96xbf16>, vector<16x96xf32> -> vector<16x96xf32>
    %c0_16 = arith.constant 0 : index
    %c0_17 = arith.constant 0 : index
    %c0_18 = arith.constant 0 : index
    %34 = vector.load %arg5[%c0_16, %c0_17, %c0_18] : memref<1x1x96xf32, #tpu.memory_space<vmem>>, vector<1x1x96xf32>
    %35 = vector.shape_cast %34 : vector<1x1x96xf32> to vector<1x96xf32>
    %36 = vector.broadcast %35 : vector<1x96xf32> to vector<16x96xf32>
    %37 = arith.addf %33, %36 : vector<16x96xf32>
    %38 = vector.extract_strided_slice %37 {offsets = [0, 0], sizes = [16, 8], strides = [1, 1]} : vector<16x96xf32> to vector<16x8xf32>
    %39 = vector.shape_cast %38 : vector<16x8xf32> to vector<2x8x8xf32>
    %40 = vector.extract_strided_slice %37 {offsets = [0, 32], sizes = [16, 8], strides = [1, 1]} : vector<16x96xf32> to vector<16x8xf32>
    %41 = vector.shape_cast %40 : vector<16x8xf32> to vector<2x8x8xf32>
    %42 = vector.extract_strided_slice %37 {offsets = [0, 64], sizes = [16, 8], strides = [1, 1]} : vector<16x96xf32> to vector<16x8xf32>
    %43 = vector.shape_cast %42 : vector<16x8xf32> to vector<2x8x8xf32>
    %44 = arith.truncf %39 : vector<2x8x8xf32> to vector<2x8x8xbf16>
    %45 = arith.truncf %41 : vector<2x8x8xf32> to vector<2x8x8xbf16>
    "tpu.trace_start"() <{level = 10 : i32, message = "nqd,nkd->nqk"}> : () -> ()
    %cst_19 = arith.constant dense<0.000000e+00> : vector<2x8x8xf32>
    %46 = tpu.matmul %44, %45, %cst_19 {dimension_numbers = #tpu.dot_dimension_numbers<[2], [2], [1], [1], [0, 0, 0, 1, 1, 1], [0], [0]>} : vector<2x8x8xbf16>, vector<2x8x8xbf16>, vector<2x8x8xf32> -> vector<2x8x8xf32>
    "tpu.trace_stop"() : () -> ()
    %cst_20 = arith.constant dense<0xFF800000> : vector<2x8xf32>
    %47 = vector.multi_reduction <maximumf>, %46, %cst_20 [2] : vector<2x8x8xf32> to vector<2x8xf32>
    %48 = vector.shape_cast %47 : vector<2x8xf32> to vector<2x8x1xf32>
    %49 = vector.broadcast %48 : vector<2x8x1xf32> to vector<2x8x8xf32>
    %50 = arith.subf %46, %49 : vector<2x8x8xf32>
    %51 = math.exp %50 : vector<2x8x8xf32>
    %cst_21 = arith.constant dense<0.000000e+00> : vector<2x8xf32>
    %52 = vector.multi_reduction <add>, %51, %cst_21 [2] : vector<2x8x8xf32> to vector<2x8xf32>
    %53 = vector.shape_cast %52 : vector<2x8xf32> to vector<2x8x1xf32>
    %54 = tpu.reciprocal %53 {approx = true} : vector<2x8x1xf32> -> vector<2x8x1xf32>
    %55 = vector.broadcast %54 : vector<2x8x1xf32> to vector<2x8x8xf32>
    %56 = arith.mulf %51, %55 : vector<2x8x8xf32>
    %57 = arith.truncf %56 : vector<2x8x8xf32> to vector<2x8x8xbf16>
    %58 = arith.truncf %43 : vector<2x8x8xf32> to vector<2x8x8xbf16>
    "tpu.trace_start"() <{level = 10 : i32, message = "nqk,nkd->nqd"}> : () -> ()
    %cst_22 = arith.constant dense<0.000000e+00> : vector<2x8x8xf32>
    %59 = tpu.matmul %57, %58, %cst_22 {dimension_numbers = #tpu.dot_dimension_numbers<[2], [1], [1], [2], [0, 0, 0, 1, 1, 2], [0], [0]>} : vector<2x8x8xbf16>, vector<2x8x8xbf16>, vector<2x8x8xf32> -> vector<2x8x8xf32>
    "tpu.trace_stop"() : () -> ()
    %60 = vector.shape_cast %59 : vector<2x8x8xf32> to vector<16x8xf32>
    %61 = arith.truncf %60 : vector<16x8xf32> to vector<16x8xbf16>
    %c0_23 = arith.constant 0 : index
    %c0_24 = arith.constant 0 : index
    %c0_25 = arith.constant 0 : index
    %62 = vector.load %arg6[%c0_23, %c0_24, %c0_25] : memref<1x32x32xbf16, #tpu.memory_space<vmem>>, vector<1x8x32xbf16>
    %63 = vector.shape_cast %62 : vector<1x8x32xbf16> to vector<8x32xbf16>
    %cst_26 = arith.constant dense<0.000000e+00> : vector<16x32xf32>
    %64 = tpu.matmul %61, %63, %cst_26 {dimension_numbers = #tpu.dot_dimension_numbers<[1], [0], [0], [1], [0, 0, 1, 1], [], []>} : vector<16x8xbf16>, vector<8x32xbf16>, vector<16x32xf32> -> vector<16x32xf32>
    %65 = vector.extract_strided_slice %37 {offsets = [0, 8], sizes = [16, 8], strides = [1, 1]} : vector<16x96xf32> to vector<16x8xf32>
    %66 = vector.shape_cast %65 : vector<16x8xf32> to vector<2x8x8xf32>
    %67 = vector.extract_strided_slice %37 {offsets = [0, 40], sizes = [16, 8], strides = [1, 1]} : vector<16x96xf32> to vector<16x8xf32>
    %68 = vector.shape_cast %67 : vector<16x8xf32> to vector<2x8x8xf32>
    %69 = vector.extract_strided_slice %37 {offsets = [0, 72], sizes = [16, 8], strides = [1, 1]} : vector<16x96xf32> to vector<16x8xf32>
    %70 = vector.shape_cast %69 : vector<16x8xf32> to vector<2x8x8xf32>
    %71 = arith.truncf %66 : vector<2x8x8xf32> to vector<2x8x8xbf16>
    %72 = arith.truncf %68 : vector<2x8x8xf32> to vector<2x8x8xbf16>
    "tpu.trace_start"() <{level = 10 : i32, message = "nqd,nkd->nqk"}> : () -> ()
    %cst_27 = arith.constant dense<0.000000e+00> : vector<2x8x8xf32>
    %73 = tpu.matmul %71, %72, %cst_27 {dimension_numbers = #tpu.dot_dimension_numbers<[2], [2], [1], [1], [0, 0, 0, 1, 1, 1], [0], [0]>} : vector<2x8x8xbf16>, vector<2x8x8xbf16>, vector<2x8x8xf32> -> vector<2x8x8xf32>
    "tpu.trace_stop"() : () -> ()
    %cst_28 = arith.constant dense<0xFF800000> : vector<2x8xf32>
    %74 = vector.multi_reduction <maximumf>, %73, %cst_28 [2] : vector<2x8x8xf32> to vector<2x8xf32>
    %75 = vector.shape_cast %74 : vector<2x8xf32> to vector<2x8x1xf32>
    %76 = vector.broadcast %75 : vector<2x8x1xf32> to vector<2x8x8xf32>
    %77 = arith.subf %73, %76 : vector<2x8x8xf32>
    %78 = math.exp %77 : vector<2x8x8xf32>
    %cst_29 = arith.constant dense<0.000000e+00> : vector<2x8xf32>
    %79 = vector.multi_reduction <add>, %78, %cst_29 [2] : vector<2x8x8xf32> to vector<2x8xf32>
    %80 = vector.shape_cast %79 : vector<2x8xf32> to vector<2x8x1xf32>
    %81 = tpu.reciprocal %80 {approx = true} : vector<2x8x1xf32> -> vector<2x8x1xf32>
    %82 = vector.broadcast %81 : vector<2x8x1xf32> to vector<2x8x8xf32>
    %83 = arith.mulf %78, %82 : vector<2x8x8xf32>
    %84 = arith.truncf %83 : vector<2x8x8xf32> to vector<2x8x8xbf16>
    %85 = arith.truncf %70 : vector<2x8x8xf32> to vector<2x8x8xbf16>
    "tpu.trace_start"() <{level = 10 : i32, message = "nqk,nkd->nqd"}> : () -> ()
    %cst_30 = arith.constant dense<0.000000e+00> : vector<2x8x8xf32>
    %86 = tpu.matmul %84, %85, %cst_30 {dimension_numbers = #tpu.dot_dimension_numbers<[2], [1], [1], [2], [0, 0, 0, 1, 1, 2], [0], [0]>} : vector<2x8x8xbf16>, vector<2x8x8xbf16>, vector<2x8x8xf32> -> vector<2x8x8xf32>
    "tpu.trace_stop"() : () -> ()
    %87 = vector.shape_cast %86 : vector<2x8x8xf32> to vector<16x8xf32>
    %88 = arith.truncf %87 : vector<16x8xf32> to vector<16x8xbf16>
    %c0_31 = arith.constant 0 : index
    %c8 = arith.constant 8 : index
    %c0_32 = arith.constant 0 : index
    %89 = vector.load %arg6[%c0_31, %c8, %c0_32] : memref<1x32x32xbf16, #tpu.memory_space<vmem>>, vector<1x8x32xbf16>
    %90 = vector.shape_cast %89 : vector<1x8x32xbf16> to vector<8x32xbf16>
    %cst_33 = arith.constant dense<0.000000e+00> : vector<16x32xf32>
    %91 = tpu.matmul %88, %90, %cst_33 {dimension_numbers = #tpu.dot_dimension_numbers<[1], [0], [0], [1], [0, 0, 1, 1], [], []>} : vector<16x8xbf16>, vector<8x32xbf16>, vector<16x32xf32> -> vector<16x32xf32>
    %92 = arith.addf %64, %91 : vector<16x32xf32>
    %93 = vector.extract_strided_slice %37 {offsets = [0, 16], sizes = [16, 8], strides = [1, 1]} : vector<16x96xf32> to vector<16x8xf32>
    %94 = vector.shape_cast %93 : vector<16x8xf32> to vector<2x8x8xf32>
    %95 = vector.extract_strided_slice %37 {offsets = [0, 48], sizes = [16, 8], strides = [1, 1]} : vector<16x96xf32> to vector<16x8xf32>
    %96 = vector.shape_cast %95 : vector<16x8xf32> to vector<2x8x8xf32>
    %97 = vector.extract_strided_slice %37 {offsets = [0, 80], sizes = [16, 8], strides = [1, 1]} : vector<16x96xf32> to vector<16x8xf32>
    %98 = vector.shape_cast %97 : vector<16x8xf32> to vector<2x8x8xf32>
    %99 = arith.truncf %94 : vector<2x8x8xf32> to vector<2x8x8xbf16>
    %100 = arith.truncf %96 : vector<2x8x8xf32> to vector<2x8x8xbf16>
    "tpu.trace_start"() <{level = 10 : i32, message = "nqd,nkd->nqk"}> : () -> ()
    %cst_34 = arith.constant dense<0.000000e+00> : vector<2x8x8xf32>
    %101 = tpu.matmul %99, %100, %cst_34 {dimension_numbers = #tpu.dot_dimension_numbers<[2], [2], [1], [1], [0, 0, 0, 1, 1, 1], [0], [0]>} : vector<2x8x8xbf16>, vector<2x8x8xbf16>, vector<2x8x8xf32> -> vector<2x8x8xf32>
    "tpu.trace_stop"() : () -> ()
    %cst_35 = arith.constant dense<0xFF800000> : vector<2x8xf32>
    %102 = vector.multi_reduction <maximumf>, %101, %cst_35 [2] : vector<2x8x8xf32> to vector<2x8xf32>
    %103 = vector.shape_cast %102 : vector<2x8xf32> to vector<2x8x1xf32>
    %104 = vector.broadcast %103 : vector<2x8x1xf32> to vector<2x8x8xf32>
    %105 = arith.subf %101, %104 : vector<2x8x8xf32>
    %106 = math.exp %105 : vector<2x8x8xf32>
    %cst_36 = arith.constant dense<0.000000e+00> : vector<2x8xf32>
    %107 = vector.multi_reduction <add>, %106, %cst_36 [2] : vector<2x8x8xf32> to vector<2x8xf32>
    %108 = vector.shape_cast %107 : vector<2x8xf32> to vector<2x8x1xf32>
    %109 = tpu.reciprocal %108 {approx = true} : vector<2x8x1xf32> -> vector<2x8x1xf32>
    %110 = vector.broadcast %109 : vector<2x8x1xf32> to vector<2x8x8xf32>
    %111 = arith.mulf %106, %110 : vector<2x8x8xf32>
    %112 = arith.truncf %111 : vector<2x8x8xf32> to vector<2x8x8xbf16>
    %113 = arith.truncf %98 : vector<2x8x8xf32> to vector<2x8x8xbf16>
    "tpu.trace_start"() <{level = 10 : i32, message = "nqk,nkd->nqd"}> : () -> ()
    %cst_37 = arith.constant dense<0.000000e+00> : vector<2x8x8xf32>
    %114 = tpu.matmul %112, %113, %cst_37 {dimension_numbers = #tpu.dot_dimension_numbers<[2], [1], [1], [2], [0, 0, 0, 1, 1, 2], [0], [0]>} : vector<2x8x8xbf16>, vector<2x8x8xbf16>, vector<2x8x8xf32> -> vector<2x8x8xf32>
    "tpu.trace_stop"() : () -> ()
    %115 = vector.shape_cast %114 : vector<2x8x8xf32> to vector<16x8xf32>
    %116 = arith.truncf %115 : vector<16x8xf32> to vector<16x8xbf16>
    %c0_38 = arith.constant 0 : index
    %c16 = arith.constant 16 : index
    %c0_39 = arith.constant 0 : index
    %117 = vector.load %arg6[%c0_38, %c16, %c0_39] : memref<1x32x32xbf16, #tpu.memory_space<vmem>>, vector<1x8x32xbf16>
    %118 = vector.shape_cast %117 : vector<1x8x32xbf16> to vector<8x32xbf16>
    %cst_40 = arith.constant dense<0.000000e+00> : vector<16x32xf32>
    %119 = tpu.matmul %116, %118, %cst_40 {dimension_numbers = #tpu.dot_dimension_numbers<[1], [0], [0], [1], [0, 0, 1, 1], [], []>} : vector<16x8xbf16>, vector<8x32xbf16>, vector<16x32xf32> -> vector<16x32xf32>
    %120 = arith.addf %92, %119 : vector<16x32xf32>
    %121 = vector.extract_strided_slice %37 {offsets = [0, 24], sizes = [16, 8], strides = [1, 1]} : vector<16x96xf32> to vector<16x8xf32>
    %122 = vector.shape_cast %121 : vector<16x8xf32> to vector<2x8x8xf32>
    %123 = vector.extract_strided_slice %37 {offsets = [0, 56], sizes = [16, 8], strides = [1, 1]} : vector<16x96xf32> to vector<16x8xf32>
    %124 = vector.shape_cast %123 : vector<16x8xf32> to vector<2x8x8xf32>
    %125 = vector.extract_strided_slice %37 {offsets = [0, 88], sizes = [16, 8], strides = [1, 1]} : vector<16x96xf32> to vector<16x8xf32>
    %126 = vector.shape_cast %125 : vector<16x8xf32> to vector<2x8x8xf32>
    %127 = arith.truncf %122 : vector<2x8x8xf32> to vector<2x8x8xbf16>
    %128 = arith.truncf %124 : vector<2x8x8xf32> to vector<2x8x8xbf16>
    "tpu.trace_start"() <{level = 10 : i32, message = "nqd,nkd->nqk"}> : () -> ()
    %cst_41 = arith.constant dense<0.000000e+00> : vector<2x8x8xf32>
    %129 = tpu.matmul %127, %128, %cst_41 {dimension_numbers = #tpu.dot_dimension_numbers<[2], [2], [1], [1], [0, 0, 0, 1, 1, 1], [0], [0]>} : vector<2x8x8xbf16>, vector<2x8x8xbf16>, vector<2x8x8xf32> -> vector<2x8x8xf32>
    "tpu.trace_stop"() : () -> ()
    %cst_42 = arith.constant dense<0xFF800000> : vector<2x8xf32>
    %130 = vector.multi_reduction <maximumf>, %129, %cst_42 [2] : vector<2x8x8xf32> to vector<2x8xf32>
    %131 = vector.shape_cast %130 : vector<2x8xf32> to vector<2x8x1xf32>
    %132 = vector.broadcast %131 : vector<2x8x1xf32> to vector<2x8x8xf32>
    %133 = arith.subf %129, %132 : vector<2x8x8xf32>
    %134 = math.exp %133 : vector<2x8x8xf32>
    %cst_43 = arith.constant dense<0.000000e+00> : vector<2x8xf32>
    %135 = vector.multi_reduction <add>, %134, %cst_43 [2] : vector<2x8x8xf32> to vector<2x8xf32>
    %136 = vector.shape_cast %135 : vector<2x8xf32> to vector<2x8x1xf32>
    %137 = tpu.reciprocal %136 {approx = true} : vector<2x8x1xf32> -> vector<2x8x1xf32>
    %138 = vector.broadcast %137 : vector<2x8x1xf32> to vector<2x8x8xf32>
    %139 = arith.mulf %134, %138 : vector<2x8x8xf32>
    %140 = arith.truncf %139 : vector<2x8x8xf32> to vector<2x8x8xbf16>
    %141 = arith.truncf %126 : vector<2x8x8xf32> to vector<2x8x8xbf16>
    "tpu.trace_start"() <{level = 10 : i32, message = "nqk,nkd->nqd"}> : () -> ()
    %cst_44 = arith.constant dense<0.000000e+00> : vector<2x8x8xf32>
    %142 = tpu.matmul %140, %141, %cst_44 {dimension_numbers = #tpu.dot_dimension_numbers<[2], [1], [1], [2], [0, 0, 0, 1, 1, 2], [0], [0]>} : vector<2x8x8xbf16>, vector<2x8x8xbf16>, vector<2x8x8xf32> -> vector<2x8x8xf32>
    "tpu.trace_stop"() : () -> ()
    %143 = vector.shape_cast %142 : vector<2x8x8xf32> to vector<16x8xf32>
    %144 = arith.truncf %143 : vector<16x8xf32> to vector<16x8xbf16>
    %c0_45 = arith.constant 0 : index
    %c24 = arith.constant 24 : index
    %c0_46 = arith.constant 0 : index
    %145 = vector.load %arg6[%c0_45, %c24, %c0_46] : memref<1x32x32xbf16, #tpu.memory_space<vmem>>, vector<1x8x32xbf16>
    %146 = vector.shape_cast %145 : vector<1x8x32xbf16> to vector<8x32xbf16>
    %cst_47 = arith.constant dense<0.000000e+00> : vector<16x32xf32>
    %147 = tpu.matmul %144, %146, %cst_47 {dimension_numbers = #tpu.dot_dimension_numbers<[1], [0], [0], [1], [0, 0, 1, 1], [], []>} : vector<16x8xbf16>, vector<8x32xbf16>, vector<16x32xf32> -> vector<16x32xf32>
    %148 = arith.addf %120, %147 : vector<16x32xf32>
    %149 = arith.addf %3, %148 : vector<16x32xf32>
    %c0_48 = arith.constant 0 : index
    %c0_49 = arith.constant 0 : index
    %c0_50 = arith.constant 0 : index
    %150 = vector.load %arg7[%c0_48, %c0_49, %c0_50] : memref<1x1x32xf32, #tpu.memory_space<vmem>>, vector<1x1x32xf32>
    %151 = vector.shape_cast %150 : vector<1x1x32xf32> to vector<1x32xf32>
    %152 = vector.broadcast %151 : vector<1x32xf32> to vector<16x32xf32>
    %153 = arith.addf %149, %152 : vector<16x32xf32>
    %cst_51 = arith.constant dense<0.000000e+00> : vector<16xf32>
    %154 = vector.multi_reduction <add>, %153, %cst_51 [1] : vector<16x32xf32> to vector<16xf32>
    %155 = vector.shape_cast %154 : vector<16xf32> to vector<16x1xf32>
    %cst_52 = arith.constant 3.200000e+01 : f32
    %156 = vector.broadcast %cst_52 : f32 to vector<16x1xf32>
    %157 = arith.divf %155, %156 : vector<16x1xf32>
    %158 = vector.broadcast %157 : vector<16x1xf32> to vector<16x32xf32>
    %159 = arith.subf %153, %158 : vector<16x32xf32>
    %160 = arith.mulf %159, %159 : vector<16x32xf32>
    %cst_53 = arith.constant dense<0.000000e+00> : vector<16xf32>
    %161 = vector.multi_reduction <add>, %160, %cst_53 [1] : vector<16x32xf32> to vector<16xf32>
    %162 = vector.shape_cast %161 : vector<16xf32> to vector<16x1xf32>
    %cst_54 = arith.constant 3.200000e+01 : f32
    %163 = vector.broadcast %cst_54 : f32 to vector<16x1xf32>
    %164 = arith.divf %162, %163 : vector<16x1xf32>
    %165 = vector.broadcast %157 : vector<16x1xf32> to vector<16x32xf32>
    %166 = arith.subf %153, %165 : vector<16x32xf32>
    %cst_55 = arith.constant 9.99999974E-6 : f32
    %167 = vector.broadcast %cst_55 : f32 to vector<16x1xf32>
    %168 = arith.addf %164, %167 : vector<16x1xf32>
    %169 = math.rsqrt %168 : vector<16x1xf32>
    %170 = vector.broadcast %169 : vector<16x1xf32> to vector<16x32xf32>
    %171 = arith.mulf %166, %170 : vector<16x32xf32>
    %c0_56 = arith.constant 0 : index
    %c0_57 = arith.constant 0 : index
    %c0_58 = arith.constant 0 : index
    %172 = vector.load %arg8[%c0_56, %c0_57, %c0_58] : memref<1x1x32xf32, #tpu.memory_space<vmem>>, vector<1x1x32xf32>
    %173 = vector.shape_cast %172 : vector<1x1x32xf32> to vector<1x32xf32>
    %174 = vector.broadcast %173 : vector<1x32xf32> to vector<16x32xf32>
    %175 = arith.mulf %171, %174 : vector<16x32xf32>
    %c0_59 = arith.constant 0 : index
    %c0_60 = arith.constant 0 : index
    %c0_61 = arith.constant 0 : index
    %176 = vector.load %arg9[%c0_59, %c0_60, %c0_61] : memref<1x1x32xf32, #tpu.memory_space<vmem>>, vector<1x1x32xf32>
    %177 = vector.shape_cast %176 : vector<1x1x32xf32> to vector<1x32xf32>
    %178 = vector.broadcast %177 : vector<1x32xf32> to vector<16x32xf32>
    %179 = arith.addf %175, %178 : vector<16x32xf32>
    %180 = arith.truncf %179 : vector<16x32xf32> to vector<16x32xbf16>
    %c0_62 = arith.constant 0 : index
    %c0_63 = arith.constant 0 : index
    %c0_64 = arith.constant 0 : index
    %181 = vector.load %arg10[%c0_62, %c0_63, %c0_64] : memref<1x32x128xbf16, #tpu.memory_space<vmem>>, vector<1x32x128xbf16>
    %182 = vector.shape_cast %181 : vector<1x32x128xbf16> to vector<32x128xbf16>
    %cst_65 = arith.constant dense<0.000000e+00> : vector<16x128xf32>
    %183 = tpu.matmul %180, %182, %cst_65 {dimension_numbers = #tpu.dot_dimension_numbers<[1], [0], [0], [1], [0, 0, 1, 1], [], []>} : vector<16x32xbf16>, vector<32x128xbf16>, vector<16x128xf32> -> vector<16x128xf32>
    %c0_66 = arith.constant 0 : index
    %c0_67 = arith.constant 0 : index
    %c0_68 = arith.constant 0 : index
    %184 = vector.load %arg11[%c0_66, %c0_67, %c0_68] : memref<1x1x128xf32, #tpu.memory_space<vmem>>, vector<1x1x128xf32>
    %185 = vector.shape_cast %184 : vector<1x1x128xf32> to vector<1x128xf32>
    %186 = vector.broadcast %185 : vector<1x128xf32> to vector<16x128xf32>
    %187 = arith.addf %183, %186 : vector<16x128xf32>
    %cst_69 = arith.constant 1.702000e+00 : f32
    %188 = vector.broadcast %cst_69 : f32 to vector<16x128xf32>
    %189 = arith.mulf %188, %187 : vector<16x128xf32>
    %190 = arith.negf %189 : vector<16x128xf32>
    %191 = math.exp %190 : vector<16x128xf32>
    %cst_70 = arith.constant 1.000000e+00 : f32
    %192 = vector.broadcast %cst_70 : f32 to vector<16x128xf32>
    %193 = arith.addf %192, %191 : vector<16x128xf32>
    %194 = arith.divf %192, %193 : vector<16x128xf32>
    %195 = arith.mulf %187, %194 : vector<16x128xf32>
    %196 = arith.truncf %195 : vector<16x128xf32> to vector<16x128xbf16>
    %c0_71 = arith.constant 0 : index
    %c0_72 = arith.constant 0 : index
    %c0_73 = arith.constant 0 : index
    %197 = vector.load %arg12[%c0_71, %c0_72, %c0_73] : memref<1x128x32xbf16, #tpu.memory_space<vmem>>, vector<1x128x32xbf16>
    %198 = vector.shape_cast %197 : vector<1x128x32xbf16> to vector<128x32xbf16>
    %cst_74 = arith.constant dense<0.000000e+00> : vector<16x32xf32>
    %199 = tpu.matmul %196, %198, %cst_74 {dimension_numbers = #tpu.dot_dimension_numbers<[1], [0], [0], [1], [0, 0, 1, 1], [], []>} : vector<16x128xbf16>, vector<128x32xbf16>, vector<16x32xf32> -> vector<16x32xf32>
    %c0_75 = arith.constant 0 : index
    %c0_76 = arith.constant 0 : index
    %c0_77 = arith.constant 0 : index
    %200 = vector.load %arg13[%c0_75, %c0_76, %c0_77] : memref<1x1x32xf32, #tpu.memory_space<vmem>>, vector<1x1x32xf32>
    %201 = vector.shape_cast %200 : vector<1x1x32xf32> to vector<1x32xf32>
    %202 = vector.broadcast %201 : vector<1x32xf32> to vector<16x32xf32>
    %203 = arith.addf %199, %202 : vector<16x32xf32>
    %204 = arith.addf %153, %203 : vector<16x32xf32>
    %c0_78 = arith.constant 0 : index
    %c0_79 = arith.constant 0 : index
    %205 = vector.load %arg15[%c0_78, %c0_79] : memref<16x32xf32, #tpu.memory_space<vmem>>, vector<16x32xf32>
    tpu.vector_store %arg15[%c0_78, %c0_79], %204 {strides = array<i32>} : memref<16x32xf32, #tpu.memory_space<vmem>>, vector<16x32xf32>,
    %c1_i32 = arith.constant 1 : i32
    %206 = arith.cmpi eq, %arg0, %c1_i32 : i32
    %207 = arith.extui %206 : i1 to i32
    %c0_i32_80 = arith.constant 0 : i32
    %208 = arith.cmpi ne, %207, %c0_i32_80 : i32
    scf.if %208 {
      %c0_81 = arith.constant 0 : index
      %c0_82 = arith.constant 0 : index
      %209 = vector.load %arg14[%c0_81, %c0_82] : memref<16x32xf32, #tpu.memory_space<vmem>>, vector<16x32xf32>
      tpu.vector_store %arg14[%c0_81, %c0_82], %204 {strides = array<i32>} : memref<16x32xf32, #tpu.memory_space<vmem>>, vector<16x32xf32>,
    } else {
    }
    return
  }
  func.func @transform_0(%arg0: i32) -> (i32, i32) {
    %c0_i32 = arith.constant 0 : i32
    %c0_i32_0 = arith.constant 0 : i32
    %c0_i32_1 = arith.constant 0 : i32
    return %c0_i32, %c0_i32_0 : i32, i32
  }
  func.func @transform_1(%arg0: i32) -> (i32, i32, i32) {
    %c0_i32 = arith.constant 0 : i32
    %c0_i32_0 = arith.constant 0 : i32
    %c0_i32_1 = arith.constant 0 : i32
    return %arg0, %c0_i32, %c0_i32_0 : i32, i32, i32
  }
  func.func @transform_2(%arg0: i32) -> (i32, i32, i32) {
    %c0_i32 = arith.constant 0 : i32
    %c0_i32_0 = arith.constant 0 : i32
    %c0_i32_1 = arith.constant 0 : i32
    return %arg0, %c0_i32, %c0_i32_0 : i32, i32, i32
  }
  func.func @transform_3(%arg0: i32) -> (i32, i32, i32) {
    %c0_i32 = arith.constant 0 : i32
    %c0_i32_0 = arith.constant 0 : i32
    %c0_i32_1 = arith.constant 0 : i32
    return %arg0, %c0_i32, %c0_i32_0 : i32, i32, i32
  }
  func.func @transform_4(%arg0: i32) -> (i32, i32, i32) {
    %c0_i32 = arith.constant 0 : i32
    %c0_i32_0 = arith.constant 0 : i32
    %c0_i32_1 = arith.constant 0 : i32
    return %arg0, %c0_i32, %c0_i32_0 : i32, i32, i32
  }
  func.func @transform_5(%arg0: i32) -> (i32, i32, i32) {
    %c0_i32 = arith.constant 0 : i32
    %c0_i32_0 = arith.constant 0 : i32
    %c0_i32_1 = arith.constant 0 : i32
    return %arg0, %c0_i32, %c0_i32_0 : i32, i32, i32
  }
  func.func @transform_6(%arg0: i32) -> (i32, i32, i32) {
    %c0_i32 = arith.constant 0 : i32
    %c0_i32_0 = arith.constant 0 : i32
    %c0_i32_1 = arith.constant 0 : i32
    return %arg0, %c0_i32, %c0_i32_0 : i32, i32, i32
  }
  func.func @transform_7(%arg0: i32) -> (i32, i32, i32) {
    %c0_i32 = arith.constant 0 : i32
    %c0_i32_0 = arith.constant 0 : i32
    %c0_i32_1 = arith.constant 0 : i32
    return %arg0, %c0_i32, %c0_i32_0 : i32, i32, i32
  }
  func.func @transform_8(%arg0: i32) -> (i32, i32, i32) {
    %c0_i32 = arith.constant 0 : i32
    %c0_i32_0 = arith.constant 0 : i32
    %c0_i32_1 = arith.constant 0 : i32
    return %arg0, %c0_i32, %c0_i32_0 : i32, i32, i32
  }
  func.func @transform_9(%arg0: i32) -> (i32, i32, i32) {
    %c0_i32 = arith.constant 0 : i32
    %c0_i32_0 = arith.constant 0 : i32
    %c0_i32_1 = arith.constant 0 : i32
    return %arg0, %c0_i32, %c0_i32_0 : i32, i32, i32
  }
  func.func @transform_10(%arg0: i32) -> (i32, i32, i32) {
    %c0_i32 = arith.constant 0 : i32
    %c0_i32_0 = arith.constant 0 : i32
    %c0_i32_1 = arith.constant 0 : i32
    return %arg0, %c0_i32, %c0_i32_0 : i32, i32, i32
  }
  func.func @transform_11(%arg0: i32) -> (i32, i32, i32) {
    %c0_i32 = arith.constant 0 : i32
    %c0_i32_0 = arith.constant 0 : i32
    %c0_i32_1 = arith.constant 0 : i32
    return %arg0, %c0_i32, %c0_i32_0 : i32, i32, i32
  }
  func.func @transform_12(%arg0: i32) -> (i32, i32, i32) {
    %c0_i32 = arith.constant 0 : i32
    %c0_i32_0 = arith.constant 0 : i32
    %c0_i32_1 = arith.constant 0 : i32
    return %arg0, %c0_i32, %c0_i32_0 : i32, i32, i32
  }
  func.func @transform_13(%arg0: i32) -> (i32, i32) {
    %c0_i32 = arith.constant 0 : i32
    %c0_i32_0 = arith.constant 0 : i32
    %c0_i32_1 = arith.constant 0 : i32
    return %c0_i32, %c0_i32_0 : i32, i32
  }
}

</mosaic_0001>

<llo_original>
// kernel: tpu_custom_call.1
$region0: #{tpu_custom_call.1}
  #allocation0 [shape = 'u32[]', space=smem, size = 0x4, offset = 0x4, fixed_abs, tag = 'smem constant byte address 0x4 - core index']
  #allocation1 [shape = 'u32[72,128]{1,0:T(1,128)}', space=vmem, size = 0x9000, scoped, tag = 'internal scratch']
  #allocation2 [shape = 'f32[16,32]{1,0:T(8,128)}', space=vmem, size = 0x2000, scoped, tag = 'scratch operand']
  %s0 = inlined_call_operand.vmem [shape: f32[16,32], index: 0, kind: input, shape index: {}]
  %s1 = inlined_call_operand.vmem [shape: f32[2,1,32], index: 1, kind: input, shape index: {}]
  %s2 = inlined_call_operand.vmem [shape: f32[2,1,32], index: 2, kind: input, shape index: {}]
  %s3 = inlined_call_operand.vmem [shape: bf16[2,32,96], index: 3, kind: input, shape index: {}]
  %s4 = inlined_call_operand.vmem [shape: f32[2,1,96], index: 4, kind: input, shape index: {}]
  %s5 = inlined_call_operand.vmem [shape: bf16[2,32,32], index: 5, kind: input, shape index: {}]
  %s6 = inlined_call_operand.vmem [shape: f32[2,1,32], index: 6, kind: input, shape index: {}]
  %s7 = inlined_call_operand.vmem [shape: f32[2,1,32], index: 7, kind: input, shape index: {}]
  %s8 = inlined_call_operand.vmem [shape: f32[2,1,32], index: 8, kind: input, shape index: {}]
  %s9 = inlined_call_operand.vmem [shape: bf16[2,32,128], index: 9, kind: input, shape index: {}]
  %s10 = inlined_call_operand.vmem [shape: f32[2,1,128], index: 10, kind: input, shape index: {}]
  %s11 = inlined_call_operand.vmem [shape: bf16[2,128,32], index: 11, kind: input, shape index: {}]
  %s12 = inlined_call_operand.vmem [shape: f32[2,1,32], index: 12, kind: input, shape index: {}]
  %s13 = inlined_call_operand.hbm [shape: f32[16,32], index: 13, kind: output, shape index: {}]
  %s14 = sld [smem:[#allocation0]]
  $region93: #{tpu_custom_call.1} parent=0
    _
  %s16 = ssub.s32 1, %s14
  %s17 = scalar_select 0, %s16, %s14
  $region1: #{tpu_custom_call.1} parent=0
    #allocation3 [shape = 'u8[8192]{0}', space=vmem, size = 0x2000, scoped, tag = 'output window, operand 0, single buffered']
    #allocation4 [shape = 's32[2]{0}', space=sflag, size = 0x8, scoped, tag = 'scoped memory for tpu_custom_call.1']
    %18 = vsyncpa [#allocation4], 0
    loop: start=0, step=1, limit=4
    $region2: #{tpu_custom_call.1} parent=1 // loop_pre_header
      _
    $region3: #{tpu_custom_call.1} parent=1 // loop_header
      %s20 = sphi 0, %s24
      %p21 = scmp.ge.s32.totalorder %s20, 4
      %s28 = sphi 0, %s28
      %s30 = sphi 0, %s28
      %s31 = sphi 0, %s30
      %s45 = sphi 0, %s31
      %s51 = sphi 0, %s53
      %s54 = sphi 0, %s51
      %s55 = sphi 0, %s54
      %s71 = sphi 0, %s55
      %s77 = sphi 0, %s79
      %s80 = sphi 0, %s77
      %s81 = sphi 0, %s80
      %s97 = sphi 0, %s81
      %s103 = sphi 0, %s105
      %s106 = sphi 0, %s103
      %s107 = sphi 0, %s106
      %s123 = sphi 0, %s107
      %s129 = sphi 0, %s131
      %s132 = sphi 0, %s129
      %s133 = sphi 0, %s132
      %s149 = sphi 0, %s133
      %s155 = sphi 0, %s157
      %s158 = sphi 0, %s155
      %s159 = sphi 0, %s158
      %s175 = sphi 0, %s159
      %s181 = sphi 0, %s183
      %s184 = sphi 0, %s181
      %s185 = sphi 0, %s184
      %s201 = sphi 0, %s185
      %s207 = sphi 0, %s209
      %s210 = sphi 0, %s207
      %s211 = sphi 0, %s210
      %s227 = sphi 0, %s211
      %s233 = sphi 0, %s235
      %s236 = sphi 0, %s233
      %s237 = sphi 0, %s236
      %s253 = sphi 0, %s237
      %s259 = sphi 0, %s261
      %s262 = sphi 0, %s259
      %s263 = sphi 0, %s262
      %s279 = sphi 0, %s263
      %s285 = sphi 0, %s287
      %s288 = sphi 0, %s285
      %s289 = sphi 0, %s288
      %s305 = sphi 0, %s289
      %s311 = sphi 0, %s313
      %s314 = sphi 0, %s311
      %s315 = sphi 0, %s314
      %s331 = sphi 0, %s315
      %s337 = sphi 0, %s339
      %s340 = sphi 0, %s337
      %s341 = sphi 0, %s340
      %s357 = sphi 0, %s341
      %s361 = sphi 0, %s361
      %s363 = sphi 0, %s361
      %s364 = sphi 0, %s363
      %s378 = sphi 0, %s364
    $region4: #{tpu_custom_call.1} parent=1 // loop_header_branch
      %23 = sbr.rel (%p21) target = $region8
    $region5: #{tpu_custom_call.1} parent=1 // loop_body
      %s25 = ssub.s32 %s20, 1
      %s26 = ssub.s32 %s20, 2
      %s27 = sadd.s32 %s20, 1
      %s29 = sadd.s32 %s28, 1
      %p32 = scmp.eq.s32.totalorder %s20, 1
      %p33 = scmp.ne.s32.totalorder %s28, %s30
      %p34 = scmp.eq.s32.totalorder %s20, 0
      %p35 = por %p33, %p34
      %p36 = scmp.ne.s32.totalorder %s28, %s30
      %p37 = scmp.eq.s32.totalorder %s25, 1
      %p38 = por %p36, %p37
      %p39 = scmp.ne.s32.totalorder %s30, %s31
      %p40 = scmp.eq.s32.totalorder %s25, 0
      %p41 = por %p39, %p40
      %p42 = scmp.ne.s32.totalorder %s30, %s31
      %p43 = scmp.eq.s32.totalorder %s26, 1
      %p44 = por %p42, %p43
      %p46 = scmp.ne.s32.totalorder %s31, %s45
      %p47 = scmp.eq.s32.totalorder %s26, 0
      %p48 = por %p46, %p47
      %s49 = ssub.s32 %s20, %s27
      %p50 = scmp.eq.s32.totalorder %s49, 0
      %s52 = sadd.s32 %s51, 1
      %s53 = scalar_select %p50, %s51, %s52
      %p56 = pneg %p50
      %p57 = scmp.eq.s32.totalorder %s20, 1
      %p58 = por %p56, %p57
      %p59 = scmp.ne.s32.totalorder %s51, %s54
      %p60 = scmp.eq.s32.totalorder %s20, 0
      %p61 = por %p59, %p60
      %p62 = scmp.ne.s32.totalorder %s51, %s54
      %p63 = scmp.eq.s32.totalorder %s25, 1
      %p64 = por %p62, %p63
      %p65 = scmp.ne.s32.totalorder %s54, %s55
      %p66 = scmp.eq.s32.totalorder %s25, 0
      %p67 = por %p65, %p66
      %p68 = scmp.ne.s32.totalorder %s54, %s55
      %p69 = scmp.eq.s32.totalorder %s26, 1
      %p70 = por %p68, %p69
      %p72 = scmp.ne.s32.totalorder %s55, %s71
      %p73 = scmp.eq.s32.totalorder %s26, 0
      %p74 = por %p72, %p73
      %s75 = ssub.s32 %s20, %s27
      %p76 = scmp.eq.s32.totalorder %s75, 0
      %s78 = sadd.s32 %s77, 1
      %s79 = scalar_select %p76, %s77, %s78
      %p82 = pneg %p76
      %p83 = scmp.eq.s32.totalorder %s20, 1
      %p84 = por %p82, %p83
      %p85 = scmp.ne.s32.totalorder %s77, %s80
      %p86 = scmp.eq.s32.totalorder %s20, 0
      %p87 = por %p85, %p86
      %p88 = scmp.ne.s32.totalorder %s77, %s80
      %p89 = scmp.eq.s32.totalorder %s25, 1
      %p90 = por %p88, %p89
      %p91 = scmp.ne.s32.totalorder %s80, %s81
      %p92 = scmp.eq.s32.totalorder %s25, 0
      %p93 = por %p91, %p92
      %p94 = scmp.ne.s32.totalorder %s80, %s81
      %p95 = scmp.eq.s32.totalorder %s26, 1
      %p96 = por %p94, %p95
      %p98 = scmp.ne.s32.totalorder %s81, %s97
      %p99 = scmp.eq.s32.totalorder %s26, 0
      %p100 = por %p98, %p99
      %s101 = ssub.s32 %s20, %s27
      %p102 = scmp.eq.s32.totalorder %s101, 0
      %s104 = sadd.s32 %s103, 1
      %s105 = scalar_select %p102, %s103, %s104
      %p108 = pneg %p102
      %p109 = scmp.eq.s32.totalorder %s20, 1
      %p110 = por %p108, %p109
      %p111 = scmp.ne.s32.totalorder %s103, %s106
      %p112 = scmp.eq.s32.totalorder %s20, 0
      %p113 = por %p111, %p112
      %p114 = scmp.ne.s32.totalorder %s103, %s106
      %p115 = scmp.eq.s32.totalorder %s25, 1
      %p116 = por %p114, %p115
      %p117 = scmp.ne.s32.totalorder %s106, %s107
      %p118 = scmp.eq.s32.totalorder %s25, 0
      %p119 = por %p117, %p118
      %p120 = scmp.ne.s32.totalorder %s106, %s107
      %p121 = scmp.eq.s32.totalorder %s26, 1
      %p122 = por %p120, %p121
      %p124 = scmp.ne.s32.totalorder %s107, %s123
      %p125 = scmp.eq.s32.totalorder %s26, 0
      %p126 = por %p124, %p125
      %s127 = ssub.s32 %s20, %s27
      %p128 = scmp.eq.s32.totalorder %s127, 0
      %s130 = sadd.s32 %s129, 1
      %s131 = scalar_select %p128, %s129, %s130
      %p134 = pneg %p128
      %p135 = scmp.eq.s32.totalorder %s20, 1
      %p136 = por %p134, %p135
      %p137 = scmp.ne.s32.totalorder %s129, %s132
      %p138 = scmp.eq.s32.totalorder %s20, 0
      %p139 = por %p137, %p138
      %p140 = scmp.ne.s32.totalorder %s129, %s132
      %p141 = scmp.eq.s32.totalorder %s25, 1
      %p142 = por %p140, %p141
      %p143 = scmp.ne.s32.totalorder %s132, %s133
      %p144 = scmp.eq.s32.totalorder %s25, 0
      %p145 = por %p143, %p144
      %p146 = scmp.ne.s32.totalorder %s132, %s133
      %p147 = scmp.eq.s32.totalorder %s26, 1
      %p148 = por %p146, %p147
      %p150 = scmp.ne.s32.totalorder %s133, %s149
      %p151 = scmp.eq.s32.totalorder %s26, 0
      %p152 = por %p150, %p151
      %s153 = ssub.s32 %s20, %s27
      %p154 = scmp.eq.s32.totalorder %s153, 0
      %s156 = sadd.s32 %s155, 1
      %s157 = scalar_select %p154, %s155, %s156
      %p160 = pneg %p154
      %p161 = scmp.eq.s32.totalorder %s20, 1
      %p162 = por %p160, %p161
      %p163 = scmp.ne.s32.totalorder %s155, %s158
      %p164 = scmp.eq.s32.totalorder %s20, 0
      %p165 = por %p163, %p164
      %p166 = scmp.ne.s32.totalorder %s155, %s158
      %p167 = scmp.eq.s32.totalorder %s25, 1
      %p168 = por %p166, %p167
      %p169 = scmp.ne.s32.totalorder %s158, %s159
      %p170 = scmp.eq.s32.totalorder %s25, 0
      %p171 = por %p169, %p170
      %p172 = scmp.ne.s32.totalorder %s158, %s159
      %p173 = scmp.eq.s32.totalorder %s26, 1
      %p174 = por %p172, %p173
      %p176 = scmp.ne.s32.totalorder %s159, %s175
      %p177 = scmp.eq.s32.totalorder %s26, 0
      %p178 = por %p176, %p177
      %s179 = ssub.s32 %s20, %s27
      %p180 = scmp.eq.s32.totalorder %s179, 0
      %s182 = sadd.s32 %s181, 1
      %s183 = scalar_select %p180, %s181, %s182
      %p186 = pneg %p180
      %p187 = scmp.eq.s32.totalorder %s20, 1
      %p188 = por %p186, %p187
      %p189 = scmp.ne.s32.totalorder %s181, %s184
      %p190 = scmp.eq.s32.totalorder %s20, 0
      %p191 = por %p189, %p190
      %p192 = scmp.ne.s32.totalorder %s181, %s184
      %p193 = scmp.eq.s32.totalorder %s25, 1
      %p194 = por %p192, %p193
      %p195 = scmp.ne.s32.totalorder %s184, %s185
      %p196 = scmp.eq.s32.totalorder %s25, 0
      %p197 = por %p195, %p196
      %p198 = scmp.ne.s32.totalorder %s184, %s185
      %p199 = scmp.eq.s32.totalorder %s26, 1
      %p200 = por %p198, %p199
      %p202 = scmp.ne.s32.totalorder %s185, %s201
      %p203 = scmp.eq.s32.totalorder %s26, 0
      %p204 = por %p202, %p203
      %s205 = ssub.s32 %s20, %s27
      %p206 = scmp.eq.s32.totalorder %s205, 0
      %s208 = sadd.s32 %s207, 1
      %s209 = scalar_select %p206, %s207, %s208
      %p212 = pneg %p206
      %p213 = scmp.eq.s32.totalorder %s20, 1
      %p214 = por %p212, %p213
      %p215 = scmp.ne.s32.totalorder %s207, %s210
      %p216 = scmp.eq.s32.totalorder %s20, 0
      %p217 = por %p215, %p216
      %p218 = scmp.ne.s32.totalorder %s207, %s210
      %p219 = scmp.eq.s32.totalorder %s25, 1
      %p220 = por %p218, %p219
      %p221 = scmp.ne.s32.totalorder %s210, %s211
      %p222 = scmp.eq.s32.totalorder %s25, 0
      %p223 = por %p221, %p222
      %p224 = scmp.ne.s32.totalorder %s210, %s211
      %p225 = scmp.eq.s32.totalorder %s26, 1
      %p226 = por %p224, %p225
      %p228 = scmp.ne.s32.totalorder %s211, %s227
      %p229 = scmp.eq.s32.totalorder %s26, 0
      %p230 = por %p228, %p229
      %s231 = ssub.s32 %s20, %s27
      %p232 = scmp.eq.s32.totalorder %s231, 0
      %s234 = sadd.s32 %s233, 1
      %s235 = scalar_select %p232, %s233, %s234
      %p238 = pneg %p232
      %p239 = scmp.eq.s32.totalorder %s20, 1
      %p240 = por %p238, %p239
      %p241 = scmp.ne.s32.totalorder %s233, %s236
      %p242 = scmp.eq.s32.totalorder %s20, 0
      %p243 = por %p241, %p242
      %p244 = scmp.ne.s32.totalorder %s233, %s236
      %p245 = scmp.eq.s32.totalorder %s25, 1
      %p246 = por %p244, %p245
      %p247 = scmp.ne.s32.totalorder %s236, %s237
      %p248 = scmp.eq.s32.totalorder %s25, 0
      %p249 = por %p247, %p248
      %p250 = scmp.ne.s32.totalorder %s236, %s237
      %p251 = scmp.eq.s32.totalorder %s26, 1
      %p252 = por %p250, %p251
      %p254 = scmp.ne.s32.totalorder %s237, %s253
      %p255 = scmp.eq.s32.totalorder %s26, 0
      %p256 = por %p254, %p255
      %s257 = ssub.s32 %s20, %s27
      %p258 = scmp.eq.s32.totalorder %s257, 0
      %s260 = sadd.s32 %s259, 1
      %s261 = scalar_select %p258, %s259, %s260
      %p264 = pneg %p258
      %p265 = scmp.eq.s32.totalorder %s20, 1
      %p266 = por %p264, %p265
      %p267 = scmp.ne.s32.totalorder %s259, %s262
      %p268 = scmp.eq.s32.totalorder %s20, 0
      %p269 = por %p267, %p268
      %p270 = scmp.ne.s32.totalorder %s259, %s262
      %p271 = scmp.eq.s32.totalorder %s25, 1
      %p272 = por %p270, %p271
      %p273 = scmp.ne.s32.totalorder %s262, %s263
      %p274 = scmp.eq.s32.totalorder %s25, 0
      %p275 = por %p273, %p274
      %p276 = scmp.ne.s32.totalorder %s262, %s263
      %p277 = scmp.eq.s32.totalorder %s26, 1
      %p278 = por %p276, %p277
      %p280 = scmp.ne.s32.totalorder %s263, %s279
      %p281 = scmp.eq.s32.totalorder %s26, 0
      %p282 = por %p280, %p281
      %s283 = ssub.s32 %s20, %s27
      %p284 = scmp.eq.s32.totalorder %s283, 0
      %s286 = sadd.s32 %s285, 1
      %s287 = scalar_select %p284, %s285, %s286
      %p290 = pneg %p284
      %p291 = scmp.eq.s32.totalorder %s20, 1
      %p292 = por %p290, %p291
      %p293 = scmp.ne.s32.totalorder %s285, %s288
      %p294 = scmp.eq.s32.totalorder %s20, 0
      %p295 = por %p293, %p294
      %p296 = scmp.ne.s32.totalorder %s285, %s288
      %p297 = scmp.eq.s32.totalorder %s25, 1
      %p298 = por %p296, %p297
      %p299 = scmp.ne.s32.totalorder %s288, %s289
      %p300 = scmp.eq.s32.totalorder %s25, 0
      %p301 = por %p299, %p300
      %p302 = scmp.ne.s32.totalorder %s288, %s289
      %p303 = scmp.eq.s32.totalorder %s26, 1
      %p304 = por %p302, %p303
      %p306 = scmp.ne.s32.totalorder %s289, %s305
      %p307 = scmp.eq.s32.totalorder %s26, 0
      %p308 = por %p306, %p307
      %s309 = ssub.s32 %s20, %s27
      %p310 = scmp.eq.s32.totalorder %s309, 0
      %s312 = sadd.s32 %s311, 1
      %s313 = scalar_select %p310, %s311, %s312
      %p316 = pneg %p310
      %p317 = scmp.eq.s32.totalorder %s20, 1
      %p318 = por %p316, %p317
      %p319 = scmp.ne.s32.totalorder %s311, %s314
      %p320 = scmp.eq.s32.totalorder %s20, 0
      %p321 = por %p319, %p320
      %p322 = scmp.ne.s32.totalorder %s311, %s314
      %p323 = scmp.eq.s32.totalorder %s25, 1
      %p324 = por %p322, %p323
      %p325 = scmp.ne.s32.totalorder %s314, %s315
      %p326 = scmp.eq.s32.totalorder %s25, 0
      %p327 = por %p325, %p326
      %p328 = scmp.ne.s32.totalorder %s314, %s315
      %p329 = scmp.eq.s32.totalorder %s26, 1
      %p330 = por %p328, %p329
      %p332 = scmp.ne.s32.totalorder %s315, %s331
      %p333 = scmp.eq.s32.totalorder %s26, 0
      %p334 = por %p332, %p333
      %s335 = ssub.s32 %s20, %s27
      %p336 = scmp.eq.s32.totalorder %s335, 0
      %s338 = sadd.s32 %s337, 1
      %s339 = scalar_select %p336, %s337, %s338
      %p342 = pneg %p336
      %p343 = scmp.eq.s32.totalorder %s20, 1
      %p344 = por %p342, %p343
      %p345 = scmp.ne.s32.totalorder %s337, %s340
      %p346 = scmp.eq.s32.totalorder %s20, 0
      %p347 = por %p345, %p346
      %p348 = scmp.ne.s32.totalorder %s337, %s340
      %p349 = scmp.eq.s32.totalorder %s25, 1
      %p350 = por %p348, %p349
      %p351 = scmp.ne.s32.totalorder %s340, %s341
      %p352 = scmp.eq.s32.totalorder %s25, 0
      %p353 = por %p351, %p352
      %p354 = scmp.ne.s32.totalorder %s340, %s341
      %p355 = scmp.eq.s32.totalorder %s26, 1
      %p356 = por %p354, %p355
      %p358 = scmp.ne.s32.totalorder %s341, %s357
      %p359 = scmp.eq.s32.totalorder %s26, 0
      %p360 = por %p358, %p359
      %s362 = sadd.s32 %s361, 1
      %p365 = scmp.eq.s32.totalorder %s20, 1
      %p366 = scmp.ne.s32.totalorder %s361, %s363
      %p367 = scmp.eq.s32.totalorder %s20, 0
      %p368 = por %p366, %p367
      %p369 = scmp.ne.s32.totalorder %s361, %s363
      %p370 = scmp.eq.s32.totalorder %s25, 1
      %p371 = por %p369, %p370
      %p372 = scmp.ne.s32.totalorder %s363, %s364
      %p373 = scmp.eq.s32.totalorder %s25, 0
      %p374 = por %p372, %p373
      %p375 = scmp.ne.s32.totalorder %s363, %s364
      %p376 = scmp.eq.s32.totalorder %s26, 1
      %p377 = por %p375, %p376
      %p379 = scmp.ne.s32.totalorder %s364, %s378
      %p380 = scmp.eq.s32.totalorder %s26, 0
      %p381 = por %p379, %p380
      %p382 = scmp.le.s32.totalorder 1, %s20
      %p383 = scmp.lt.s32.totalorder %s20, 3
      %p384 = pnand %p382, %p383
      %p385 = pneg %p384
      // Predicated region
      $region9: #{tpu_custom_call.1} parent=5 // pred_check
        _
      $region10: #{tpu_custom_call.1} parent=5 // pred_check_branch
        %387 = sbr.rel (%p384) target = $region12
      $region11: #{tpu_custom_call.1} parent=5 // pred_region
        %s388 = ssub.s32 %s20, 1
        // Predicated region
        $region13: #{tpu_custom_call.1} parent=11 // pred_check
          %p389 = pneg %p41
        $region14: #{tpu_custom_call.1} parent=11 // pred_check_branch
          %391 = sbr.rel (%p389) target = $region16
        $region15: #{tpu_custom_call.1} parent=11 // pred_region
          _
        $region16: #{tpu_custom_call.1} parent=11 // pred_fallthru
          _
      $region12: #{tpu_custom_call.1} parent=5 // pred_fallthru
        _
      %p392 = scmp.lt.s32.totalorder %s20, 2
      // Predicated region
      $region17: #{tpu_custom_call.1} parent=5 // pred_check
        %p393 = pneg %p392
      $region18: #{tpu_custom_call.1} parent=5 // pred_check_branch
        %395 = sbr.rel (%p393) target = $region20
      $region19: #{tpu_custom_call.1} parent=5 // pred_region
        // Predicated region
        $region21: #{tpu_custom_call.1} parent=19 // pred_check
          %p396 = pneg %p61
        $region22: #{tpu_custom_call.1} parent=19 // pred_check_branch
          %398 = sbr.rel (%p396) target = $region24
        $region23: #{tpu_custom_call.1} parent=19 // pred_region
          %p399 = scmp.lt.s32.totalorder %s20, 1
          %s400 = scalar_select %p399, %s20, 1
          %s401 = scalar_lea.vmem %s1, %s400
        $region24: #{tpu_custom_call.1} parent=19 // pred_fallthru
          _
        // Predicated region
        $region25: #{tpu_custom_call.1} parent=19 // pred_check
          %p402 = pneg %p87
        $region26: #{tpu_custom_call.1} parent=19 // pred_check_branch
          %404 = sbr.rel (%p402) target = $region28
        $region27: #{tpu_custom_call.1} parent=19 // pred_region
          %p405 = scmp.lt.s32.totalorder %s20, 1
          %s406 = scalar_select %p405, %s20, 1
          %s407 = scalar_lea.vmem %s2, %s406
        $region28: #{tpu_custom_call.1} parent=19 // pred_fallthru
          _
        // Predicated region
        $region29: #{tpu_custom_call.1} parent=19 // pred_check
          %p408 = pneg %p113
        $region30: #{tpu_custom_call.1} parent=19 // pred_check_branch
          %410 = sbr.rel (%p408) target = $region32
        $region31: #{tpu_custom_call.1} parent=19 // pred_region
          %p411 = scmp.lt.s32.totalorder %s20, 1
          %s412 = scalar_select %p411, %s20, 1
          %s413 = smul.addr %s412, 4
          %s414 = smul.addr %s413, 4
          %s415 = scalar_lea.vmem %s3, %s414
        $region32: #{tpu_custom_call.1} parent=19 // pred_fallthru
          _
        // Predicated region
        $region33: #{tpu_custom_call.1} parent=19 // pred_check
          %p416 = pneg %p139
        $region34: #{tpu_custom_call.1} parent=19 // pred_check_branch
          %418 = sbr.rel (%p416) target = $region36
        $region35: #{tpu_custom_call.1} parent=19 // pred_region
          %p419 = scmp.lt.s32.totalorder %s20, 1
          %s420 = scalar_select %p419, %s20, 1
          %s421 = scalar_lea.vmem %s4, %s420
        $region36: #{tpu_custom_call.1} parent=19 // pred_fallthru
          _
        // Predicated region
        $region37: #{tpu_custom_call.1} parent=19 // pred_check
          %p422 = pneg %p165
        $region38: #{tpu_custom_call.1} parent=19 // pred_check_branch
          %424 = sbr.rel (%p422) target = $region40
        $region39: #{tpu_custom_call.1} parent=19 // pred_region
          %p425 = scmp.lt.s32.totalorder %s20, 1
          %s426 = scalar_select %p425, %s20, 1
          %s427 = smul.addr %s426, 4
          %s428 = smul.addr %s427, 4
          %s429 = scalar_lea.vmem %s5, %s428
        $region40: #{tpu_custom_call.1} parent=19 // pred_fallthru
          _
        // Predicated region
        $region41: #{tpu_custom_call.1} parent=19 // pred_check
          %p430 = pneg %p191
        $region42: #{tpu_custom_call.1} parent=19 // pred_check_branch
          %432 = sbr.rel (%p430) target = $region44
        $region43: #{tpu_custom_call.1} parent=19 // pred_region
          %p433 = scmp.lt.s32.totalorder %s20, 1
          %s434 = scalar_select %p433, %s20, 1
          %s435 = scalar_lea.vmem %s6, %s434
        $region44: #{tpu_custom_call.1} parent=19 // pred_fallthru
          _
        // Predicated region
        $region45: #{tpu_custom_call.1} parent=19 // pred_check
          %p436 = pneg %p217
        $region46: #{tpu_custom_call.1} parent=19 // pred_check_branch
          %438 = sbr.rel (%p436) target = $region48
        $region47: #{tpu_custom_call.1} parent=19 // pred_region
          %p439 = scmp.lt.s32.totalorder %s20, 1
          %s440 = scalar_select %p439, %s20, 1
          %s441 = scalar_lea.vmem %s7, %s440
        $region48: #{tpu_custom_call.1} parent=19 // pred_fallthru
          _
        // Predicated region
        $region49: #{tpu_custom_call.1} parent=19 // pred_check
          %p442 = pneg %p243
        $region50: #{tpu_custom_call.1} parent=19 // pred_check_branch
          %444 = sbr.rel (%p442) target = $region52
        $region51: #{tpu_custom_call.1} parent=19 // pred_region
          %p445 = scmp.lt.s32.totalorder %s20, 1
          %s446 = scalar_select %p445, %s20, 1
          %s447 = scalar_lea.vmem %s8, %s446
        $region52: #{tpu_custom_call.1} parent=19 // pred_fallthru
          _
        // Predicated region
        $region53: #{tpu_custom_call.1} parent=19 // pred_check
          %p448 = pneg %p269
        $region54: #{tpu_custom_call.1} parent=19 // pred_check_branch
          %450 = sbr.rel (%p448) target = $region56
        $region55: #{tpu_custom_call.1} parent=19 // pred_region
          %p451 = scmp.lt.s32.totalorder %s20, 1
          %s452 = scalar_select %p451, %s20, 1
          %s453 = smul.addr %s452, 4
          %s454 = smul.addr %s453, 4
          %s455 = scalar_lea.vmem %s9, %s454
        $region56: #{tpu_custom_call.1} parent=19 // pred_fallthru
          _
        // Predicated region
        $region57: #{tpu_custom_call.1} parent=19 // pred_check
          %p456 = pneg %p295
        $region58: #{tpu_custom_call.1} parent=19 // pred_check_branch
          %458 = sbr.rel (%p456) target = $region60
        $region59: #{tpu_custom_call.1} parent=19 // pred_region
          %p459 = scmp.lt.s32.totalorder %s20, 1
          %s460 = scalar_select %p459, %s20, 1
          %s461 = scalar_lea.vmem %s10, %s460
        $region60: #{tpu_custom_call.1} parent=19 // pred_fallthru
          _
        // Predicated region
        $region61: #{tpu_custom_call.1} parent=19 // pred_check
          %p462 = pneg %p321
        $region62: #{tpu_custom_call.1} parent=19 // pred_check_branch
          %464 = sbr.rel (%p462) target = $region64
        $region63: #{tpu_custom_call.1} parent=19 // pred_region
          %p465 = scmp.lt.s32.totalorder %s20, 1
          %s466 = scalar_select %p465, %s20, 1
          %s467 = smul.addr %s466, 16
          %s468 = smul.addr %s467, 4
          %s469 = scalar_lea.vmem %s11, %s468
        $region64: #{tpu_custom_call.1} parent=19 // pred_fallthru
          _
        // Predicated region
        $region65: #{tpu_custom_call.1} parent=19 // pred_check
          %p470 = pneg %p347
        $region66: #{tpu_custom_call.1} parent=19 // pred_check_branch
          %472 = sbr.rel (%p470) target = $region68
        $region67: #{tpu_custom_call.1} parent=19 // pred_region
          %p473 = scmp.lt.s32.totalorder %s20, 1
          %s474 = scalar_select %p473, %s20, 1
          %s475 = scalar_lea.vmem %s12, %s474
        $region68: #{tpu_custom_call.1} parent=19 // pred_fallthru
          _
      $region20: #{tpu_custom_call.1} parent=5 // pred_fallthru
        _
      %p476 = scmp.le.s32.totalorder 1, %s20
      %p477 = scmp.lt.s32.totalorder %s20, 3
      %p478 = pnand %p476, %p477
      %p479 = pneg %p478
      // Predicated region
      $region69: #{tpu_custom_call.1} parent=5 // pred_check
        _
      $region70: #{tpu_custom_call.1} parent=5 // pred_check_branch
        %481 = sbr.rel (%p478) target = $region72
      $region71: #{tpu_custom_call.1} parent=5 // pred_region
        %s482 = ssub.s32 %s20, 1
        %p483 = pneg %p41
        %p484 = pneg %p38
        %p485 = scmp.lt.s32.totalorder %s25, 1
        %s486 = scalar_select %p485, %s25, 1
        %s487 = scalar_lea.vmem %s1, %s486
        %p488 = pneg %p67
        %p489 = pneg %p64
        %p490 = scmp.lt.s32.totalorder %s25, 1
        %s491 = scalar_select %p490, %s25, 1
        %s492 = scalar_lea.vmem %s2, %s491
        %p493 = pneg %p93
        %p494 = pneg %p90
        %p495 = scmp.lt.s32.totalorder %s25, 1
        %s496 = scalar_select %p495, %s25, 1
        %s497 = smul.addr %s496, 4
        %s498 = smul.addr %s497, 4
        %s499 = scalar_lea.vmem %s3, %s498
        %p500 = pneg %p119
        %p501 = pneg %p116
        %p502 = scmp.lt.s32.totalorder %s25, 1
        %s503 = scalar_select %p502, %s25, 1
        %s504 = scalar_lea.vmem %s4, %s503
        %p505 = pneg %p145
        %p506 = pneg %p142
        %p507 = scmp.lt.s32.totalorder %s25, 1
        %s508 = scalar_select %p507, %s25, 1
        %s509 = smul.addr %s508, 4
        %s510 = smul.addr %s509, 4
        %s511 = scalar_lea.vmem %s5, %s510
        %p512 = pneg %p171
        %p513 = pneg %p168
        %p514 = scmp.lt.s32.totalorder %s25, 1
        %s515 = scalar_select %p514, %s25, 1
        %s516 = scalar_lea.vmem %s6, %s515
        %p517 = pneg %p197
        %p518 = pneg %p194
        %p519 = scmp.lt.s32.totalorder %s25, 1
        %s520 = scalar_select %p519, %s25, 1
        %s521 = scalar_lea.vmem %s7, %s520
        %p522 = pneg %p223
        %p523 = pneg %p220
        %p524 = scmp.lt.s32.totalorder %s25, 1
        %s525 = scalar_select %p524, %s25, 1
        %s526 = scalar_lea.vmem %s8, %s525
        %p527 = pneg %p249
        %p528 = pneg %p246
        %p529 = scmp.lt.s32.totalorder %s25, 1
        %s530 = scalar_select %p529, %s25, 1
        %s531 = smul.addr %s530, 4
        %s532 = smul.addr %s531, 4
        %s533 = scalar_lea.vmem %s9, %s532
        %p534 = pneg %p275
        %p535 = pneg %p272
        %p536 = scmp.lt.s32.totalorder %s25, 1
        %s537 = scalar_select %p536, %s25, 1
        %s538 = scalar_lea.vmem %s10, %s537
        %p539 = pneg %p301
        %p540 = pneg %p298
        %p541 = scmp.lt.s32.totalorder %s25, 1
        %s542 = scalar_select %p541, %s25, 1
        %s543 = smul.addr %s542, 16
        %s544 = smul.addr %s543, 4
        %s545 = scalar_lea.vmem %s11, %s544
        %p546 = pneg %p327
        %p547 = pneg %p324
        %p548 = scmp.lt.s32.totalorder %s25, 1
        %s549 = scalar_select %p548, %s25, 1
        %s550 = scalar_lea.vmem %s12, %s549
        %p551 = pneg %p353
        %p552 = pneg %p350
        %p553 = pneg %p374
        %p554 = pneg %p371
        %p555 = scmp.lt.s32.totalorder %s25, 1
        %s556 = scalar_select %p555, %s25, 1
        %s557 = scalar_lea.vmem %s1, %s556
        %p558 = scmp.lt.s32.totalorder %s25, 1
        %s559 = scalar_select %p558, %s25, 1
        %s560 = scalar_lea.vmem %s2, %s559
        %p561 = scmp.lt.s32.totalorder %s25, 1
        %s562 = scalar_select %p561, %s25, 1
        %s563 = smul.addr %s562, 4
        %s564 = smul.addr %s563, 4
        %s565 = scalar_lea.vmem %s3, %s564
        %p566 = scmp.lt.s32.totalorder %s25, 1
        %s567 = scalar_select %p566, %s25, 1
        %s568 = scalar_lea.vmem %s4, %s567
        %p569 = scmp.lt.s32.totalorder %s25, 1
        %s570 = scalar_select %p569, %s25, 1
        %s571 = smul.addr %s570, 4
        %s572 = smul.addr %s571, 4
        %s573 = scalar_lea.vmem %s5, %s572
        %p574 = scmp.lt.s32.totalorder %s25, 1
        %s575 = scalar_select %p574, %s25, 1
        %s576 = scalar_lea.vmem %s6, %s575
        %p577 = scmp.lt.s32.totalorder %s25, 1
        %s578 = scalar_select %p577, %s25, 1
        %s579 = scalar_lea.vmem %s7, %s578
        %p580 = scmp.lt.s32.totalorder %s25, 1
        %s581 = scalar_select %p580, %s25, 1
        %s582 = scalar_lea.vmem %s8, %s581
        %p583 = scmp.lt.s32.totalorder %s25, 1
        %s584 = scalar_select %p583, %s25, 1
        %s585 = smul.addr %s584, 4
        %s586 = smul.addr %s585, 4
        %s587 = scalar_lea.vmem %s9, %s586
        %p588 = scmp.lt.s32.totalorder %s25, 1
        %s589 = scalar_select %p588, %s25, 1
        %s590 = scalar_lea.vmem %s10, %s589
        %p591 = scmp.lt.s32.totalorder %s25, 1
        %s592 = scalar_select %p591, %s25, 1
        %s593 = smul.addr %s592, 16
        %s594 = smul.addr %s593, 4
        %s595 = scalar_lea.vmem %s11, %s594
        %p596 = scmp.lt.s32.totalorder %s25, 1
        %s597 = scalar_select %p596, %s25, 1
        %s598 = scalar_lea.vmem %s12, %s597
        %p600 = scmp.eq.s32.totalorder %s25, 0
        // Predicated region
        $region73: #{tpu_custom_call.1} parent=71 // pred_check
          %p601 = pneg %p600
        $region74: #{tpu_custom_call.1} parent=71 // pred_check_branch
          %603 = sbr.rel (%p601) target = $region76
        $region75: #{tpu_custom_call.1} parent=71 // pred_region
          %v604 = vld [vmem:[%s0] sm:$0xff]
          %v605 = vld [vmem:[%s0 + $0x8] sm:$0xff]
          %vm606 = vcmask 261120
          %607 = vst.msk [vmem:[#allocation2] sm:$0xff] %vm606, %v604
          %608 = vst.msk [vmem:[#allocation2 + $0x8] sm:$0xff] %vm606, %v605
        $region76: #{tpu_custom_call.1} parent=71 // pred_fallthru
          _
        %v609 = vld [vmem:[#allocation2] sm:$0xff]
        %v610 = vld [vmem:[#allocation2 + $0x8] sm:$0xff]
        %vm611 = vcmask 261120
        %v612 = vsel %vm611, %v609, 0.0
        %613 = vadd.xlane.f32.xlu0 %v612
        %v614 = vpop.xlane.xlu0 %613
        %v615 = vsel %vm611, %v610, 0.0
        %616 = vadd.xlane.f32.xlu0 %v615
        %v617 = vpop.xlane.xlu0 %616
        %v618 = vrcp.pop 32.0
        %v619 = vmul.f32 32.0, %v618
        %v620 = vsub.f32 1.0, %v619
        %v621 = vmul.f32 %v618, %v620
        %v622 = vadd.f32 %v618, %v621
        %vm623 = vweird.f32 %v618
        %v624 = vsel %vm623, %v618, %v622
        %v625 = vmul.f32 %v614, %v624
        %v626 = vmul.f32 %v617, %v624
        %v627 = vsub.f32 %v609, %v625
        %v628 = vsub.f32 %v610, %v626
        %v629 = vmul.f32 %v627, %v627
        %v630 = vmul.f32 %v628, %v628
        %v631 = vsel %vm611, %v629, 0.0
        %632 = vadd.xlane.f32.xlu0 %v631
        %v633 = vpop.xlane.xlu0 %632
        %v634 = vsel %vm611, %v630, 0.0
        %635 = vadd.xlane.f32.xlu0 %v634
        %v636 = vpop.xlane.xlu0 %635
        %v637 = vmul.f32 %v633, %v624
        %v638 = vmul.f32 %v636, %v624
        %v639 = vadd.f32 %v637, 1e-05
        %v640 = vadd.f32 %v638, 1e-05
        %v641 = vrsqrt.pop %v639
        %v642 = vmul.f32 %v641, %v639
        %v643 = vmul.f32 %v642, %v641
        %v644 = vmul.f32 0.5, %v643
        %v645 = vsub.f32 1.5, %v644
        %v646 = vmul.f32 %v641, %v645
        %vm647 = vweird.f32 %v639
        %vm648 = vweird.f32 %v641
        %vm649 = vmor %vm647, %vm648
        %v650 = vsel %vm649, %v641, %v646
        %v651 = vrsqrt.pop %v640
        %v652 = vmul.f32 %v651, %v640
        %v653 = vmul.f32 %v652, %v651
        %v654 = vmul.f32 0.5, %v653
        %v655 = vsub.f32 1.5, %v654
        %v656 = vmul.f32 %v651, %v655
        %vm657 = vweird.f32 %v640
        %vm658 = vweird.f32 %v651
        %vm659 = vmor %vm657, %vm658
        %v660 = vsel %vm659, %v651, %v656
        %v661 = vmul.f32 %v627, %v650
        %v662 = vmul.f32 %v628, %v660
        %v663 = vld [vmem:[%s557] sm:$0x1]
        %v665 = vperm.slane %v663, 0
        %v667 = vmul.f32 %v661, %v665
        %v668 = vmul.f32 %v662, %v665
        %v669 = vld [vmem:[%s560] sm:$0x1]
        %v671 = vperm.slane %v669, 0
        %v673 = vadd.f32 %v667, %v671
        %v674 = vadd.f32 %v668, %v671
        %v675 = vpack.c.bf16 %v674, %v673
        %v676 = vld [vmem:[%s565] sm:$0xf]
        %v677 = vld [vmem:[%s565 + $0x4] sm:$0xf]
        %v678 = vld [vmem:[%s565 + $0x8] sm:$0xf]
        %v679 = vld [vmem:[%s565 + $0xc] sm:$0xf]
        %v680 = vld [vmem:[%s568] sm:$0x1]
        %v682 = vperm.slane %v680, 0
        %v688 = vunpack.c.l.b16 %v676
        %v689 = vunpack.c.l.b16 %v677
        %v690 = vunpack.c.l.b16 %v678
        %v691 = vunpack.c.l.b16 %v679
        %v692 = vpack.c.b16 %v689, %v688
        %v693 = vpack.c.b16 %v691, %v690
        %v697 = vsel %vm611, %v675, 0
        %699 = vmatpush.bf16.msra.mxu0 0
        %700 = vmatpush.bf16.msra.mxu0 0
        %701 = vmatpush.bf16.msra.mxu0 0
        %702 = vmatpush.bf16.msra.mxu0 0
        %703 = vmatpush.bf16.msra.mxu0 0
        %704 = vmatpush.bf16.msra.mxu0 0
        %705 = vmatpush.bf16.msra.mxu0 %v693
        %706 = vmatpush.bf16.msra.mxu0 %v692
        %707 = vmatmul.bf16.gmra.mxu0 %v697
        %v708 = vpop.f32.mrf.mxu0
        %v709 = vadd.f32 %v682, %v708
        %v710 = vpop.f32.mrf.mxu0
        %v711 = vadd.f32 %v682, %v710
        %712 = vdwg.mxu0
        %v713 = vpack.c.bf16 %v709, %v709
        %v714 = vpack.c.bf16 %v711, %v711
        %v716 = vunpack.c.l.b16 %v713
        %v717 = vpack.c.b16 %v716, %v716
        %718 = vrot.lane.b32.xlu0 %v717, 96
        %v719 = vpop.permute.xlu0 %718
        %vm720 = vcmask 64512
        %v722 = vsel %vm720, %v713, 0
        %v725 = vsel %vm720, %v719, 0
        %727 = vmatpush.bf16.xpose.msra.mxu0 0
        %728 = vmatpush.bf16.xpose.msra.mxu0 0
        %729 = vmatpush.bf16.xpose.msra.mxu0 0
        %730 = vmatpush.bf16.xpose.msra.mxu0 0
        %731 = vmatpush.bf16.xpose.msra.mxu0 0
        %732 = vmatpush.bf16.xpose.msra.mxu0 0
        %733 = vmatpush.bf16.xpose.msra.mxu0 0
        %734 = vmatpush.bf16.xpose.msra.mxu0 %v725
        %735 = vmatmul.bf16.gmra.mxu0 %v722
        %v736 = vpop.f32.mrf.mxu0
        %v737 = vadd.f32 0.0, %v736
        %v738 = vpop.f32.mrf.mxu0
        %739 = vdwg.mxu0
        %v741 = vunpack.c.l.b16 %v714
        %v742 = vpack.c.b16 %v741, %v741
        %743 = vrot.lane.b32.xlu0 %v742, 96
        %v744 = vpop.permute.xlu0 %743
        %v746 = vsel %vm720, %v714, 0
        %v749 = vsel %vm720, %v744, 0
        %751 = vmatpush.bf16.xpose.msra.mxu0 0
        %752 = vmatpush.bf16.xpose.msra.mxu0 0
        %753 = vmatpush.bf16.xpose.msra.mxu0 0
        %754 = vmatpush.bf16.xpose.msra.mxu0 0
        %755 = vmatpush.bf16.xpose.msra.mxu0 0
        %756 = vmatpush.bf16.xpose.msra.mxu0 0
        %757 = vmatpush.bf16.xpose.msra.mxu0 0
        %758 = vmatpush.bf16.xpose.msra.mxu0 %v749
        %759 = vmatmul.bf16.gmra.mxu0 %v746
        %v760 = vpop.f32.mrf.mxu0
        %v761 = vadd.f32 0.0, %v760
        %v762 = vpop.f32.mrf.mxu0
        %763 = vdwg.mxu0
        %v764 = vsel %vm720, %v737, -inf
        %765 = vmax.xlane.f32.xlu0 %v764
        %v766 = vpop.xlane.xlu0 %765
        %v767 = vsel %vm720, %v761, -inf
        %768 = vmax.xlane.f32.xlu0 %v767
        %v769 = vpop.xlane.xlu0 %768
        %v770 = vsub.f32 %v737, %v766
        %v771 = vsub.f32 %v761, %v769
        %v772 = vmul.f32 %v770, 1.442695
        %v773 = vpow.pop %v772
        %v774 = vmul.f32 %v771, 1.442695
        %v775 = vpow.pop %v774
        %v776 = vsel %vm720, %v773, 0.0
        %777 = vadd.xlane.f32.xlu0 %v776
        %v778 = vpop.xlane.xlu0 %777
        %v779 = vsel %vm720, %v775, 0.0
        %780 = vadd.xlane.f32.xlu0 %v779
        %v781 = vpop.xlane.xlu0 %780
        %v782 = vrcp.pop %v778
        %v783 = vrcp.pop %v781
        %v784 = vmul.f32 %v773, %v782
        %v785 = vmul.f32 %v775, %v783
        %v786 = vpack.c.bf16 %v784, %v784
        %v787 = vpack.c.bf16 %v785, %v785
        %788 = vrot.lane.b32.xlu0 %v717, 64
        %v789 = vpop.permute.xlu0 %788
        %v791 = vsel %vm720, %v786, 0
        %vm793 = vcmask 1043456
        %v795 = vsel %vm793, %v789, 0
        %797 = vmatpush.bf16.msra.mxu0 0
        %798 = vmatpush.bf16.msra.mxu0 0
        %799 = vmatpush.bf16.msra.mxu0 0
        %800 = vmatpush.bf16.msra.mxu0 0
        %801 = vmatpush.bf16.msra.mxu0 0
        %802 = vmatpush.bf16.msra.mxu0 0
        %803 = vmatpush.bf16.msra.mxu0 0
        %804 = vmatpush.bf16.msra.mxu0 %v795
        %805 = vmatmul.bf16.gmra.mxu0 %v791
        %v806 = vpop.f32.mrf.mxu0
        %v807 = vadd.f32 0.0, %v806
        %v808 = vpop.f32.mrf.mxu0
        %809 = vdwg.mxu0
        %810 = vrot.lane.b32.xlu0 %v742, 64
        %v811 = vpop.permute.xlu0 %810
        %v813 = vsel %vm720, %v787, 0
        %v816 = vsel %vm793, %v811, 0
        %818 = vmatpush.bf16.msra.mxu0 0
        %819 = vmatpush.bf16.msra.mxu0 0
        %820 = vmatpush.bf16.msra.mxu0 0
        %821 = vmatpush.bf16.msra.mxu0 0
        %822 = vmatpush.bf16.msra.mxu0 0
        %823 = vmatpush.bf16.msra.mxu0 0
        %824 = vmatpush.bf16.msra.mxu0 0
        %825 = vmatpush.bf16.msra.mxu0 %v816
        %826 = vmatmul.bf16.gmra.mxu0 %v813
        %v827 = vpop.f32.mrf.mxu0
        %v828 = vadd.f32 0.0, %v827
        %v829 = vpop.f32.mrf.mxu0
        %830 = vdwg.mxu0
        %v831 = vpack.c.bf16 %v828, %v807
        %v832 = vld [vmem:[%s573] sm:$0xf]
        %833 = vrot.lane.b32.xlu0 %v717, 120
        %v834 = vpop.permute.xlu0 %833
        %835 = vrot.lane.b32.xlu0 %v717, 88
        %v836 = vpop.permute.xlu0 %835
        %v838 = vsel %vm720, %v834, 0
        %v841 = vsel %vm720, %v836, 0
        %843 = vmatpush.bf16.xpose.msra.mxu0 0
        %844 = vmatpush.bf16.xpose.msra.mxu0 0
        %845 = vmatpush.bf16.xpose.msra.mxu0 0
        %846 = vmatpush.bf16.xpose.msra.mxu0 0
        %847 = vmatpush.bf16.xpose.msra.mxu0 0
        %848 = vmatpush.bf16.xpose.msra.mxu0 0
        %849 = vmatpush.bf16.xpose.msra.mxu0 0
        %850 = vmatpush.bf16.xpose.msra.mxu0 %v841
        %851 = vmatmul.bf16.gmra.mxu0 %v838
        %v852 = vpop.f32.mrf.mxu0
        %v853 = vadd.f32 0.0, %v852
        %v854 = vpop.f32.mrf.mxu0
        %855 = vdwg.mxu0
        %856 = vrot.lane.b32.xlu0 %v742, 120
        %v857 = vpop.permute.xlu0 %856
        %858 = vrot.lane.b32.xlu0 %v742, 88
        %v859 = vpop.permute.xlu0 %858
        %v861 = vsel %vm720, %v857, 0
        %v864 = vsel %vm720, %v859, 0
        %866 = vmatpush.bf16.xpose.msra.mxu0 0
        %867 = vmatpush.bf16.xpose.msra.mxu0 0
        %868 = vmatpush.bf16.xpose.msra.mxu0 0
        %869 = vmatpush.bf16.xpose.msra.mxu0 0
        %870 = vmatpush.bf16.xpose.msra.mxu0 0
        %871 = vmatpush.bf16.xpose.msra.mxu0 0
        %872 = vmatpush.bf16.xpose.msra.mxu0 0
        %873 = vmatpush.bf16.xpose.msra.mxu0 %v864
        %874 = vmatmul.bf16.gmra.mxu0 %v861
        %v875 = vpop.f32.mrf.mxu0
        %v876 = vadd.f32 0.0, %v875
        %v877 = vpop.f32.mrf.mxu0
        %878 = vdwg.mxu0
        %v879 = vsel %vm720, %v853, -inf
        %880 = vmax.xlane.f32.xlu0 %v879
        %v881 = vpop.xlane.xlu0 %880
        %v882 = vsel %vm720, %v876, -inf
        %883 = vmax.xlane.f32.xlu0 %v882
        %v884 = vpop.xlane.xlu0 %883
        %v885 = vsub.f32 %v853, %v881
        %v886 = vsub.f32 %v876, %v884
        %v887 = vmul.f32 %v885, 1.442695
        %v888 = vpow.pop %v887
        %v889 = vmul.f32 %v886, 1.442695
        %v890 = vpow.pop %v889
        %v891 = vsel %vm720, %v888, 0.0
        %892 = vadd.xlane.f32.xlu0 %v891
        %v893 = vpop.xlane.xlu0 %892
        %v894 = vsel %vm720, %v890, 0.0
        %895 = vadd.xlane.f32.xlu0 %v894
        %v896 = vpop.xlane.xlu0 %895
        %v897 = vrcp.pop %v893
        %v898 = vrcp.pop %v896
        %v899 = vmul.f32 %v888, %v897
        %v900 = vmul.f32 %v890, %v898
        %v901 = vpack.c.bf16 %v899, %v899
        %v902 = vpack.c.bf16 %v900, %v900
        %903 = vrot.lane.b32.xlu0 %v717, 56
        %v904 = vpop.permute.xlu0 %903
        %v906 = vsel %vm720, %v901, 0
        %v909 = vsel %vm793, %v904, 0
        %911 = vmatpush.bf16.msra.mxu0 0
        %912 = vmatpush.bf16.msra.mxu0 0
        %913 = vmatpush.bf16.msra.mxu0 0
        %914 = vmatpush.bf16.msra.mxu0 0
        %915 = vmatpush.bf16.msra.mxu0 0
        %916 = vmatpush.bf16.msra.mxu0 0
        %917 = vmatpush.bf16.msra.mxu0 0
        %918 = vmatpush.bf16.msra.mxu0 %v909
        %919 = vmatmul.bf16.gmra.mxu0 %v906
        %v920 = vpop.f32.mrf.mxu0
        %v921 = vadd.f32 0.0, %v920
        %v922 = vpop.f32.mrf.mxu0
        %923 = vdwg.mxu0
        %924 = vrot.lane.b32.xlu0 %v742, 56
        %v925 = vpop.permute.xlu0 %924
        %v927 = vsel %vm720, %v902, 0
        %v930 = vsel %vm793, %v925, 0
        %932 = vmatpush.bf16.msra.mxu0 0
        %933 = vmatpush.bf16.msra.mxu0 0
        %934 = vmatpush.bf16.msra.mxu0 0
        %935 = vmatpush.bf16.msra.mxu0 0
        %936 = vmatpush.bf16.msra.mxu0 0
        %937 = vmatpush.bf16.msra.mxu0 0
        %938 = vmatpush.bf16.msra.mxu0 0
        %939 = vmatpush.bf16.msra.mxu0 %v930
        %940 = vmatmul.bf16.gmra.mxu0 %v927
        %v941 = vpop.f32.mrf.mxu0
        %v942 = vadd.f32 0.0, %v941
        %v943 = vpop.f32.mrf.mxu0
        %944 = vdwg.mxu0
        %v945 = vpack.c.bf16 %v942, %v921
        %v946 = vld [vmem:[%s573 + $0x4] sm:$0xf]
        %v948 = vsel %vm720, %v945, 0
        %v951 = vsel %vm793, %v946, 0
        %953 = vmatpush.bf16.msra.mxu0 0
        %954 = vmatpush.bf16.msra.mxu0 0
        %955 = vmatpush.bf16.msra.mxu0 0
        %956 = vmatpush.bf16.msra.mxu0 0
        %957 = vmatpush.bf16.msra.mxu0 0
        %958 = vmatpush.bf16.msra.mxu0 0
        %959 = vmatpush.bf16.msra.mxu0 0
        %960 = vmatpush.bf16.msra.mxu0 %v951
        %961 = vmatmul.bf16.gmra.mxu0 %v948
        %v962 = vpop.f32.mrf.mxu0
        %v963 = vadd.f32 0.0, %v962
        %v964 = vpop.f32.mrf.mxu0
        %v965 = vadd.f32 0.0, %v964
        %966 = vdwg.mxu0
        %v968 = vsel %vm720, %v831, 0
        %v971 = vsel %vm793, %v832, 0
        %973 = vmatpush.bf16.msra.mxu0 0
        %974 = vmatpush.bf16.msra.mxu0 0
        %975 = vmatpush.bf16.msra.mxu0 0
        %976 = vmatpush.bf16.msra.mxu0 0
        %977 = vmatpush.bf16.msra.mxu0 0
        %978 = vmatpush.bf16.msra.mxu0 0
        %979 = vmatpush.bf16.msra.mxu0 0
        %980 = vmatpush.bf16.msra.mxu0 %v971
        %981 = vmatmul.bf16.gmra.mxu0 %v968
        %v982 = vpop.f32.mrf.mxu0
        %v983 = vadd.f32 %v963, %v982
        %v984 = vpop.f32.mrf.mxu0
        %v985 = vadd.f32 %v965, %v984
        %986 = vdwg.mxu0
        %987 = vrot.lane.b32.xlu0 %v717, 112
        %v988 = vpop.permute.xlu0 %987
        %989 = vrot.lane.b32.xlu0 %v717, 80
        %v990 = vpop.permute.xlu0 %989
        %v992 = vsel %vm720, %v988, 0
        %v995 = vsel %vm720, %v990, 0
        %997 = vmatpush.bf16.xpose.msra.mxu0 0
        %998 = vmatpush.bf16.xpose.msra.mxu0 0
        %999 = vmatpush.bf16.xpose.msra.mxu0 0
        %1000 = vmatpush.bf16.xpose.msra.mxu0 0
        %1001 = vmatpush.bf16.xpose.msra.mxu0 0
        %1002 = vmatpush.bf16.xpose.msra.mxu0 0
        %1003 = vmatpush.bf16.xpose.msra.mxu0 0
        %1004 = vmatpush.bf16.xpose.msra.mxu0 %v995
        %1005 = vmatmul.bf16.gmra.mxu0 %v992
        %v1006 = vpop.f32.mrf.mxu0
        %v1007 = vadd.f32 0.0, %v1006
        %v1008 = vpop.f32.mrf.mxu0
        %1009 = vdwg.mxu0
        %1010 = vrot.lane.b32.xlu0 %v742, 112
        %v1011 = vpop.permute.xlu0 %1010
        %1012 = vrot.lane.b32.xlu0 %v742, 80
        %v1013 = vpop.permute.xlu0 %1012
        %v1015 = vsel %vm720, %v1011, 0
        %v1018 = vsel %vm720, %v1013, 0
        %1020 = vmatpush.bf16.xpose.msra.mxu0 0
        %1021 = vmatpush.bf16.xpose.msra.mxu0 0
        %1022 = vmatpush.bf16.xpose.msra.mxu0 0
        %1023 = vmatpush.bf16.xpose.msra.mxu0 0
        %1024 = vmatpush.bf16.xpose.msra.mxu0 0
        %1025 = vmatpush.bf16.xpose.msra.mxu0 0
        %1026 = vmatpush.bf16.xpose.msra.mxu0 0
        %1027 = vmatpush.bf16.xpose.msra.mxu0 %v1018
        %1028 = vmatmul.bf16.gmra.mxu0 %v1015
        %v1029 = vpop.f32.mrf.mxu0
        %v1030 = vadd.f32 0.0, %v1029
        %v1031 = vpop.f32.mrf.mxu0
        %1032 = vdwg.mxu0
        %v1033 = vsel %vm720, %v1007, -inf
        %1034 = vmax.xlane.f32.xlu0 %v1033
        %v1035 = vpop.xlane.xlu0 %1034
        %v1036 = vsel %vm720, %v1030, -inf
        %1037 = vmax.xlane.f32.xlu0 %v1036
        %v1038 = vpop.xlane.xlu0 %1037
        %v1039 = vsub.f32 %v1007, %v1035
        %v1040 = vsub.f32 %v1030, %v1038
        %v1041 = vmul.f32 %v1039, 1.442695
        %v1042 = vpow.pop %v1041
        %v1043 = vmul.f32 %v1040, 1.442695
        %v1044 = vpow.pop %v1043
        %v1045 = vsel %vm720, %v1042, 0.0
        %1046 = vadd.xlane.f32.xlu0 %v1045
        %v1047 = vpop.xlane.xlu0 %1046
        %v1048 = vsel %vm720, %v1044, 0.0
        %1049 = vadd.xlane.f32.xlu0 %v1048
        %v1050 = vpop.xlane.xlu0 %1049
        %v1051 = vrcp.pop %v1047
        %v1052 = vrcp.pop %v1050
        %v1053 = vmul.f32 %v1042, %v1051
        %v1054 = vmul.f32 %v1044, %v1052
        %v1055 = vpack.c.bf16 %v1053, %v1053
        %v1056 = vpack.c.bf16 %v1054, %v1054
        %1057 = vrot.lane.b32.xlu0 %v717, 48
        %v1058 = vpop.permute.xlu0 %1057
        %v1060 = vsel %vm720, %v1055, 0
        %v1063 = vsel %vm793, %v1058, 0
        %1065 = vmatpush.bf16.msra.mxu0 0
        %1066 = vmatpush.bf16.msra.mxu0 0
        %1067 = vmatpush.bf16.msra.mxu0 0
        %1068 = vmatpush.bf16.msra.mxu0 0
        %1069 = vmatpush.bf16.msra.mxu0 0
        %1070 = vmatpush.bf16.msra.mxu0 0
        %1071 = vmatpush.bf16.msra.mxu0 0
        %1072 = vmatpush.bf16.msra.mxu0 %v1063
        %1073 = vmatmul.bf16.gmra.mxu0 %v1060
        %v1074 = vpop.f32.mrf.mxu0
        %v1075 = vadd.f32 0.0, %v1074
        %v1076 = vpop.f32.mrf.mxu0
        %1077 = vdwg.mxu0
        %1078 = vrot.lane.b32.xlu0 %v742, 48
        %v1079 = vpop.permute.xlu0 %1078
        %v1081 = vsel %vm720, %v1056, 0
        %v1084 = vsel %vm793, %v1079, 0
        %1086 = vmatpush.bf16.msra.mxu0 0
        %1087 = vmatpush.bf16.msra.mxu0 0
        %1088 = vmatpush.bf16.msra.mxu0 0
        %1089 = vmatpush.bf16.msra.mxu0 0
        %1090 = vmatpush.bf16.msra.mxu0 0
        %1091 = vmatpush.bf16.msra.mxu0 0
        %1092 = vmatpush.bf16.msra.mxu0 0
        %1093 = vmatpush.bf16.msra.mxu0 %v1084
        %1094 = vmatmul.bf16.gmra.mxu0 %v1081
        %v1095 = vpop.f32.mrf.mxu0
        %v1096 = vadd.f32 0.0, %v1095
        %v1097 = vpop.f32.mrf.mxu0
        %1098 = vdwg.mxu0
        %v1099 = vpack.c.bf16 %v1096, %v1075
        %v1100 = vld [vmem:[%s573 + $0x8] sm:$0xf]
        %v1102 = vsel %vm720, %v1099, 0
        %v1105 = vsel %vm793, %v1100, 0
        %1107 = vmatpush.bf16.msra.mxu0 0
        %1108 = vmatpush.bf16.msra.mxu0 0
        %1109 = vmatpush.bf16.msra.mxu0 0
        %1110 = vmatpush.bf16.msra.mxu0 0
        %1111 = vmatpush.bf16.msra.mxu0 0
        %1112 = vmatpush.bf16.msra.mxu0 0
        %1113 = vmatpush.bf16.msra.mxu0 0
        %1114 = vmatpush.bf16.msra.mxu0 %v1105
        %1115 = vmatmul.bf16.gmra.mxu0 %v1102
        %v1116 = vpop.f32.mrf.mxu0
        %v1117 = vadd.f32 0.0, %v1116
        %v1118 = vpop.f32.mrf.mxu0
        %v1119 = vadd.f32 0.0, %v1118
        %1120 = vdwg.mxu0
        %v1121 = vadd.f32 %v983, %v1117
        %v1122 = vadd.f32 %v985, %v1119
        %1123 = vrot.lane.b32.xlu0 %v717, 104
        %v1124 = vpop.permute.xlu0 %1123
        %1125 = vrot.lane.b32.xlu0 %v717, 72
        %v1126 = vpop.permute.xlu0 %1125
        %v1128 = vsel %vm720, %v1124, 0
        %v1131 = vsel %vm720, %v1126, 0
        %1133 = vmatpush.bf16.xpose.msra.mxu0 0
        %1134 = vmatpush.bf16.xpose.msra.mxu0 0
        %1135 = vmatpush.bf16.xpose.msra.mxu0 0
        %1136 = vmatpush.bf16.xpose.msra.mxu0 0
        %1137 = vmatpush.bf16.xpose.msra.mxu0 0
        %1138 = vmatpush.bf16.xpose.msra.mxu0 0
        %1139 = vmatpush.bf16.xpose.msra.mxu0 0
        %1140 = vmatpush.bf16.xpose.msra.mxu0 %v1131
        %1141 = vmatmul.bf16.gmra.mxu0 %v1128
        %v1142 = vpop.f32.mrf.mxu0
        %v1143 = vadd.f32 0.0, %v1142
        %v1144 = vpop.f32.mrf.mxu0
        %1145 = vdwg.mxu0
        %1146 = vrot.lane.b32.xlu0 %v742, 104
        %v1147 = vpop.permute.xlu0 %1146
        %1148 = vrot.lane.b32.xlu0 %v742, 72
        %v1149 = vpop.permute.xlu0 %1148
        %v1151 = vsel %vm720, %v1147, 0
        %v1154 = vsel %vm720, %v1149, 0
        %1156 = vmatpush.bf16.xpose.msra.mxu0 0
        %1157 = vmatpush.bf16.xpose.msra.mxu0 0
        %1158 = vmatpush.bf16.xpose.msra.mxu0 0
        %1159 = vmatpush.bf16.xpose.msra.mxu0 0
        %1160 = vmatpush.bf16.xpose.msra.mxu0 0
        %1161 = vmatpush.bf16.xpose.msra.mxu0 0
        %1162 = vmatpush.bf16.xpose.msra.mxu0 0
        %1163 = vmatpush.bf16.xpose.msra.mxu0 %v1154
        %1164 = vmatmul.bf16.gmra.mxu0 %v1151
        %v1165 = vpop.f32.mrf.mxu0
        %v1166 = vadd.f32 0.0, %v1165
        %v1167 = vpop.f32.mrf.mxu0
        %1168 = vdwg.mxu0
        %v1169 = vsel %vm720, %v1143, -inf
        %1170 = vmax.xlane.f32.xlu0 %v1169
        %v1171 = vpop.xlane.xlu0 %1170
        %v1172 = vsel %vm720, %v1166, -inf
        %1173 = vmax.xlane.f32.xlu0 %v1172
        %v1174 = vpop.xlane.xlu0 %1173
        %v1175 = vsub.f32 %v1143, %v1171
        %v1176 = vsub.f32 %v1166, %v1174
        %v1177 = vmul.f32 %v1175, 1.442695
        %v1178 = vpow.pop %v1177
        %v1179 = vmul.f32 %v1176, 1.442695
        %v1180 = vpow.pop %v1179
        %v1181 = vsel %vm720, %v1178, 0.0
        %1182 = vadd.xlane.f32.xlu0 %v1181
        %v1183 = vpop.xlane.xlu0 %1182
        %v1184 = vsel %vm720, %v1180, 0.0
        %1185 = vadd.xlane.f32.xlu0 %v1184
        %v1186 = vpop.xlane.xlu0 %1185
        %v1187 = vrcp.pop %v1183
        %v1188 = vrcp.pop %v1186
        %v1189 = vmul.f32 %v1178, %v1187
        %v1190 = vmul.f32 %v1180, %v1188
        %v1191 = vpack.c.bf16 %v1189, %v1189
        %v1192 = vpack.c.bf16 %v1190, %v1190
        %1193 = vrot.lane.b32.xlu0 %v717, 40
        %v1194 = vpop.permute.xlu0 %1193
        %v1196 = vsel %vm720, %v1191, 0
        %v1199 = vsel %vm793, %v1194, 0
        %1201 = vmatpush.bf16.msra.mxu0 0
        %1202 = vmatpush.bf16.msra.mxu0 0
        %1203 = vmatpush.bf16.msra.mxu0 0
        %1204 = vmatpush.bf16.msra.mxu0 0
        %1205 = vmatpush.bf16.msra.mxu0 0
        %1206 = vmatpush.bf16.msra.mxu0 0
        %1207 = vmatpush.bf16.msra.mxu0 0
        %1208 = vmatpush.bf16.msra.mxu0 %v1199
        %1209 = vmatmul.bf16.gmra.mxu0 %v1196
        %v1210 = vpop.f32.mrf.mxu0
        %v1211 = vadd.f32 0.0, %v1210
        %v1212 = vpop.f32.mrf.mxu0
        %1213 = vdwg.mxu0
        %1214 = vrot.lane.b32.xlu0 %v742, 40
        %v1215 = vpop.permute.xlu0 %1214
        %v1217 = vsel %vm720, %v1192, 0
        %v1220 = vsel %vm793, %v1215, 0
        %1222 = vmatpush.bf16.msra.mxu0 0
        %1223 = vmatpush.bf16.msra.mxu0 0
        %1224 = vmatpush.bf16.msra.mxu0 0
        %1225 = vmatpush.bf16.msra.mxu0 0
        %1226 = vmatpush.bf16.msra.mxu0 0
        %1227 = vmatpush.bf16.msra.mxu0 0
        %1228 = vmatpush.bf16.msra.mxu0 0
        %1229 = vmatpush.bf16.msra.mxu0 %v1220
        %1230 = vmatmul.bf16.gmra.mxu0 %v1217
        %v1231 = vpop.f32.mrf.mxu0
        %v1232 = vadd.f32 0.0, %v1231
        %v1233 = vpop.f32.mrf.mxu0
        %1234 = vdwg.mxu0
        %v1235 = vpack.c.bf16 %v1232, %v1211
        %v1236 = vld [vmem:[%s573 + $0xc] sm:$0xf]
        %v1238 = vsel %vm720, %v1235, 0
        %v1241 = vsel %vm793, %v1236, 0
        %1243 = vmatpush.bf16.msra.mxu0 0
        %1244 = vmatpush.bf16.msra.mxu0 0
        %1245 = vmatpush.bf16.msra.mxu0 0
        %1246 = vmatpush.bf16.msra.mxu0 0
        %1247 = vmatpush.bf16.msra.mxu0 0
        %1248 = vmatpush.bf16.msra.mxu0 0
        %1249 = vmatpush.bf16.msra.mxu0 0
        %1250 = vmatpush.bf16.msra.mxu0 %v1241
        %1251 = vmatmul.bf16.gmra.mxu0 %v1238
        %v1252 = vpop.f32.mrf.mxu0
        %v1253 = vadd.f32 0.0, %v1252
        %v1254 = vpop.f32.mrf.mxu0
        %v1255 = vadd.f32 0.0, %v1254
        %1256 = vdwg.mxu0
        %v1257 = vadd.f32 %v1121, %v1253
        %v1258 = vadd.f32 %v1122, %v1255
        %v1259 = vadd.f32 %v609, %v1257
        %v1260 = vadd.f32 %v610, %v1258
        %v1261 = vld [vmem:[%s576] sm:$0x1]
        %v1263 = vperm.slane %v1261, 0
        %v1265 = vadd.f32 %v1259, %v1263
        %v1266 = vadd.f32 %v1260, %v1263
        %v1267 = vsel %vm611, %v1265, 0.0
        %1268 = vadd.xlane.f32.xlu0 %v1267
        %v1269 = vpop.xlane.xlu0 %1268
        %v1270 = vsel %vm611, %v1266, 0.0
        %1271 = vadd.xlane.f32.xlu0 %v1270
        %v1272 = vpop.xlane.xlu0 %1271
        %v1273 = vmul.f32 %v1269, %v624
        %v1274 = vmul.f32 %v1272, %v624
        %v1275 = vsub.f32 %v1265, %v1273
        %v1276 = vsub.f32 %v1266, %v1274
        %v1277 = vmul.f32 %v1275, %v1275
        %v1278 = vmul.f32 %v1276, %v1276
        %v1279 = vsel %vm611, %v1277, 0.0
        %1280 = vadd.xlane.f32.xlu0 %v1279
        %v1281 = vpop.xlane.xlu0 %1280
        %v1282 = vsel %vm611, %v1278, 0.0
        %1283 = vadd.xlane.f32.xlu0 %v1282
        %v1284 = vpop.xlane.xlu0 %1283
        %v1285 = vmul.f32 %v1281, %v624
        %v1286 = vmul.f32 %v1284, %v624
        %v1287 = vadd.f32 %v1285, 1e-05
        %v1288 = vadd.f32 %v1286, 1e-05
        %v1289 = vrsqrt.pop %v1287
        %v1290 = vmul.f32 %v1289, %v1287
        %v1291 = vmul.f32 %v1290, %v1289
        %v1292 = vmul.f32 0.5, %v1291
        %v1293 = vsub.f32 1.5, %v1292
        %v1294 = vmul.f32 %v1289, %v1293
        %vm1295 = vweird.f32 %v1287
        %vm1296 = vweird.f32 %v1289
        %vm1297 = vmor %vm1295, %vm1296
        %v1298 = vsel %vm1297, %v1289, %v1294
        %v1299 = vrsqrt.pop %v1288
        %v1300 = vmul.f32 %v1299, %v1288
        %v1301 = vmul.f32 %v1300, %v1299
        %v1302 = vmul.f32 0.5, %v1301
        %v1303 = vsub.f32 1.5, %v1302
        %v1304 = vmul.f32 %v1299, %v1303
        %vm1305 = vweird.f32 %v1288
        %vm1306 = vweird.f32 %v1299
        %vm1307 = vmor %vm1305, %vm1306
        %v1308 = vsel %vm1307, %v1299, %v1304
        %v1309 = vmul.f32 %v1275, %v1298
        %v1310 = vmul.f32 %v1276, %v1308
        %v1311 = vld [vmem:[%s579] sm:$0x1]
        %v1313 = vperm.slane %v1311, 0
        %v1315 = vmul.f32 %v1309, %v1313
        %v1316 = vmul.f32 %v1310, %v1313
        %v1317 = vld [vmem:[%s582] sm:$0x1]
        %v1319 = vperm.slane %v1317, 0
        %v1321 = vadd.f32 %v1315, %v1319
        %v1322 = vadd.f32 %v1316, %v1319
        %v1323 = vpack.c.bf16 %v1322, %v1321
        %v1324 = vld [vmem:[%s587] sm:$0xf]
        %v1325 = vld [vmem:[%s587 + $0x4] sm:$0xf]
        %v1326 = vld [vmem:[%s587 + $0x8] sm:$0xf]
        %v1327 = vld [vmem:[%s587 + $0xc] sm:$0xf]
        %v1328 = vld [vmem:[%s590] sm:$0x1]
        %v1330 = vperm.slane %v1328, 0
        %v1336 = vunpack.c.l.b16 %v1324
        %v1337 = vunpack.c.l.b16 %v1325
        %v1338 = vunpack.c.l.b16 %v1326
        %v1339 = vunpack.c.l.b16 %v1327
        %v1340 = vpack.c.b16 %v1337, %v1336
        %v1341 = vpack.c.b16 %v1339, %v1338
        %v1345 = vsel %vm611, %v1323, 0
        %1347 = vmatpush.bf16.msra.mxu0 0
        %1348 = vmatpush.bf16.msra.mxu0 0
        %1349 = vmatpush.bf16.msra.mxu0 0
        %1350 = vmatpush.bf16.msra.mxu0 0
        %1351 = vmatpush.bf16.msra.mxu0 0
        %1352 = vmatpush.bf16.msra.mxu0 0
        %1353 = vmatpush.bf16.msra.mxu0 %v1341
        %1354 = vmatpush.bf16.msra.mxu0 %v1340
        %1355 = vmatmul.bf16.gmra.mxu0 %v1345
        %v1356 = vpop.f32.mrf.mxu0
        %v1357 = vadd.f32 %v1330, %v1356
        %v1358 = vpop.f32.mrf.mxu0
        %v1359 = vadd.f32 %v1330, %v1358
        %1360 = vdwg.mxu0
        %v1361 = vmul.f32 %v1357, 1.702
        %v1362 = vmul.f32 %v1359, 1.702
        %v1363 = vxor.u32 %v1361, 2147483648
        %v1364 = vxor.u32 %v1362, 2147483648
        %v1365 = vmul.f32 %v1363, 1.442695
        %v1366 = vpow.pop %v1365
        %v1367 = vmul.f32 %v1364, 1.442695
        %v1368 = vpow.pop %v1367
        %v1369 = vadd.f32 %v1366, 1.0
        %v1370 = vadd.f32 %v1368, 1.0
        %v1371 = vrcp.pop %v1369
        %v1372 = vmul.f32 %v1369, %v1371
        %v1373 = vsub.f32 1.0, %v1372
        %v1374 = vmul.f32 %v1371, %v1373
        %v1375 = vadd.f32 %v1371, %v1374
        %vm1376 = vweird.f32 %v1369
        %vm1377 = vweird.f32 %v1371
        %vm1378 = vmor %vm1376, %vm1377
        %v1379 = vsel %vm1378, %v1371, %v1375
        %v1380 = vand.u32 2147483647, %v1369
        %vm1381 = vcmp.eq.f32.partialorder %v1380, 8.507059e+37
        %v1382 = vand.u32 %v1369, 2147483648
        %v1383 = vor.u32 1.1754944e-38, %v1382
        %v1384 = vsel %vm1381, %v1383, %v1379
        %v1385 = vmul.f32 1.0, %v1384
        %v1386 = vrcp.pop %v1370
        %v1387 = vmul.f32 %v1370, %v1386
        %v1388 = vsub.f32 1.0, %v1387
        %v1389 = vmul.f32 %v1386, %v1388
        %v1390 = vadd.f32 %v1386, %v1389
        %vm1391 = vweird.f32 %v1370
        %vm1392 = vweird.f32 %v1386
        %vm1393 = vmor %vm1391, %vm1392
        %v1394 = vsel %vm1393, %v1386, %v1390
        %v1395 = vand.u32 2147483647, %v1370
        %vm1396 = vcmp.eq.f32.partialorder %v1395, 8.507059e+37
        %v1397 = vand.u32 %v1370, 2147483648
        %v1398 = vor.u32 1.1754944e-38, %v1397
        %v1399 = vsel %vm1396, %v1398, %v1394
        %v1400 = vmul.f32 1.0, %v1399
        %v1401 = vmul.f32 %v1357, %v1385
        %v1402 = vmul.f32 %v1359, %v1400
        %v1403 = vpack.c.bf16 %v1402, %v1401
        %v1404 = vld [vmem:[%s595] sm:$0xf]
        %v1405 = vld [vmem:[%s595 + $0x4] sm:$0xf]
        %v1406 = vld [vmem:[%s595 + $0x8] sm:$0xf]
        %v1407 = vld [vmem:[%s595 + $0xc] sm:$0xf]
        %v1408 = vld [vmem:[%s595 + $0x10] sm:$0xf]
        %v1409 = vld [vmem:[%s595 + $0x14] sm:$0xf]
        %v1410 = vld [vmem:[%s595 + $0x18] sm:$0xf]
        %v1411 = vld [vmem:[%s595 + $0x1c] sm:$0xf]
        %v1412 = vld [vmem:[%s595 + $0x20] sm:$0xf]
        %v1413 = vld [vmem:[%s595 + $0x24] sm:$0xf]
        %v1414 = vld [vmem:[%s595 + $0x28] sm:$0xf]
        %v1415 = vld [vmem:[%s595 + $0x2c] sm:$0xf]
        %v1416 = vld [vmem:[%s595 + $0x30] sm:$0xf]
        %v1417 = vld [vmem:[%s595 + $0x34] sm:$0xf]
        %v1418 = vld [vmem:[%s595 + $0x38] sm:$0xf]
        %v1419 = vld [vmem:[%s595 + $0x3c] sm:$0xf]
        %v1420 = vld [vmem:[%s598] sm:$0x1]
        %v1422 = vperm.slane %v1420, 0
        %v1440 = vunpack.c.l.b16 %v1404
        %v1441 = vunpack.c.l.b16 %v1405
        %v1442 = vunpack.c.l.b16 %v1406
        %v1443 = vunpack.c.l.b16 %v1407
        %v1444 = vunpack.c.l.b16 %v1408
        %v1445 = vunpack.c.l.b16 %v1409
        %v1446 = vunpack.c.l.b16 %v1410
        %v1447 = vunpack.c.l.b16 %v1411
        %v1448 = vunpack.c.l.b16 %v1412
        %v1449 = vunpack.c.l.b16 %v1413
        %v1450 = vunpack.c.l.b16 %v1414
        %v1451 = vunpack.c.l.b16 %v1415
        %v1452 = vunpack.c.l.b16 %v1416
        %v1453 = vunpack.c.l.b16 %v1417
        %v1454 = vunpack.c.l.b16 %v1418
        %v1455 = vunpack.c.l.b16 %v1419
        %v1456 = vpack.c.b16 %v1441, %v1440
        %v1457 = vpack.c.b16 %v1443, %v1442
        %v1458 = vpack.c.b16 %v1445, %v1444
        %v1459 = vpack.c.b16 %v1447, %v1446
        %v1460 = vpack.c.b16 %v1449, %v1448
        %v1461 = vpack.c.b16 %v1451, %v1450
        %v1462 = vpack.c.b16 %v1453, %v1452
        %v1463 = vpack.c.b16 %v1455, %v1454
        %1472 = vmatpush.bf16.msra.mxu0 %v1463
        %1473 = vmatpush.bf16.msra.mxu0 %v1462
        %1474 = vmatpush.bf16.msra.mxu0 %v1461
        %1475 = vmatpush.bf16.msra.mxu0 %v1460
        %1476 = vmatpush.bf16.msra.mxu0 %v1459
        %1477 = vmatpush.bf16.msra.mxu0 %v1458
        %1478 = vmatpush.bf16.msra.mxu0 %v1457
        %1479 = vmatpush.bf16.msra.mxu0 %v1456
        %1480 = vmatmul.bf16.gmra.mxu0 %v1403
        %v1481 = vpop.f32.mrf.mxu0
        %v1482 = vadd.f32 %v1422, %v1481
        %v1483 = vpop.f32.mrf.mxu0
        %v1484 = vadd.f32 %v1422, %v1483
        %1485 = vdwg.mxu0
        %v1486 = vadd.f32 %v1265, %v1482
        %v1487 = vadd.f32 %v1266, %v1484
        %1488 = vst.msk [vmem:[#allocation2] sm:$0xff] %vm611, %v1486
        %1489 = vst.msk [vmem:[#allocation2 + $0x8] sm:$0xff] %vm611, %v1487
        %p1490 = scmp.eq.s32.totalorder %s25, 1
        // Predicated region
        $region77: #{tpu_custom_call.1} parent=71 // pred_check
          %p1491 = pneg %p1490
        $region78: #{tpu_custom_call.1} parent=71 // pred_check_branch
          %1493 = sbr.rel (%p1491) target = $region80
        $region79: #{tpu_custom_call.1} parent=71 // pred_region
          %1494 = vst.msk [vmem:[#allocation3] sm:$0xff] %vm611, %v1486
          %1495 = vst.msk [vmem:[#allocation3 + $0x8] sm:$0xff] %vm611, %v1487
        $region80: #{tpu_custom_call.1} parent=71 // pred_fallthru
          _
        // Predicated region
        $region81: #{tpu_custom_call.1} parent=71 // pred_check
          %p1496 = pneg %p371
        $region82: #{tpu_custom_call.1} parent=71 // pred_check_branch
          %1498 = sbr.rel (%p1496) target = $region84
        $region83: #{tpu_custom_call.1} parent=71 // pred_region
          %1500 = vsyncadd [#allocation4], 0
          %s1501 = sshll.u32 [#allocation3], 4
          %s1502 = int_to_ptr.vmem [resolvable:$true] %s1501
          %s1503 = sshll.u32 %s13, 4
          %s1504 = int_to_ptr.hbm [resolvable:$true] %s1503
          %1509 = dma.vmem_to_hbm [thread:$0]  %s1502, 256, %s1504, [#allocation4], 128, 128, 8
        $region84: #{tpu_custom_call.1} parent=71 // pred_fallthru
          _
        // Predicated region
        $region85: #{tpu_custom_call.1} parent=71 // pred_check
          %p1510 = pneg %p371
        $region86: #{tpu_custom_call.1} parent=71 // pred_check_branch
          %1512 = sbr.rel (%p1510) target = $region88
        $region87: #{tpu_custom_call.1} parent=71 // pred_region
          %1514 = dma.done [#allocation4], 256
        $region88: #{tpu_custom_call.1} parent=71 // pred_fallthru
          _
      $region72: #{tpu_custom_call.1} parent=5 // pred_fallthru
        _
      %p1515 = scmp.le.s32.totalorder 2, %s20
      // Predicated region
      $region89: #{tpu_custom_call.1} parent=5 // pred_check
        %p1516 = pneg %p1515
      $region90: #{tpu_custom_call.1} parent=5 // pred_check_branch
        %1518 = sbr.rel (%p1516) target = $region92
      $region91: #{tpu_custom_call.1} parent=5 // pred_region
        %s1519 = ssub.s32 %s20, 2
      $region92: #{tpu_custom_call.1} parent=5 // pred_fallthru
        _
    $region6: #{tpu_custom_call.1} parent=1 // loop_footer
      %s24 = sadd.s32 1, %s20
    $region7: #{tpu_custom_call.1} parent=1 // loop_footer_branch
      %19 = sbr.rel target = $region3
    $region8: #{tpu_custom_call.1} parent=1 // loop_exit
      _
    %1520 = vsyncpa [#allocation4], 1
    %s1521 = scalar_lea.sflag [#allocation4], 1
    %1522 = vsyncpa %s1521, 1

</llo_original>
